<compile_context>
chip_gen: v7x
topology: tpu7x:2x2x1
jax: 0.10.0
libtpu: 0.0.40
codegen_flags: <defaults>
</compile_context>

<pallas_src>
import jax
import jax.numpy as jnp
from jax.experimental import pallas as pl
from jax.experimental.pallas import tpu as pltpu

# ----------------------------- configuration --------------------------------
IMG_C, IMG_HW, PATCH = 3, 16, 8
N_IMG_TOK = (IMG_HW // PATCH) ** 2          # 4 image tokens (<ImageHere> slot)
KDIM = IMG_C * PATCH * PATCH                # 192 (patch feature dim)
VIS_DIM = 32
VOCAB = 128
D_MODEL = 32
N_HEADS = 2
D_HEAD = D_MODEL // N_HEADS
D_FF = 64
N_LAYERS = 2
SEG0_LEN, SEG1_LEN = 4, 8                   # prompt segments around the image
SEQ_LEN = SEG0_LEN + N_IMG_TOK + SEG1_LEN   # 16
IGNORE_INDEX = -200
TRAIN_NUM = 2


# ------------------------------ fused kernel ---------------------------------
def _minigpt_fused_kernel(
    patches_ref,      # [1, T, KDIM]       bf16 (patch rows placed at image slot)
    text_emb_ref,     # [1, T, D]          f32  (image-slot rows are zero)
    labels_ref,       # [1, T, 1]          i32  (shifted labels; last row IGNORE)
    w_vis_ref,        # [KDIM, D]          bf16 (folded w_patch @ w_vis_proj)
    attn_norm_ref,    # [L, 1, D]          f32
    wqkv_ref,         # [L, D, 3*D]        bf16
    wo_ref,           # [L, D, D]          bf16
    mlp_norm_ref,     # [L, 1, D]          f32
    w13_ref,          # [L, D, 2*D_FF]     bf16
    w2_ref,           # [L, D_FF, D]       bf16
    final_norm_ref,   # [1, D]             f32
    lm_head_ref,      # [D, VOCAB]         bf16
    loss_ref,         # [1, 1, 128]        f32
):
    f32, bf16 = jnp.float32, jnp.bfloat16
    t, d = SEQ_LEN, D_MODEL
    neg = jnp.float32(-1e30)

    # ---- encode_img (folded vision proj) + get_context_emb mixing ----------
    # Patch rows already sit at the <ImageHere> rows (wrapper layout glue), so a
    # single matmul-and-add replaces the old sel-matrix MXU scatter.
    x = text_emb_ref[0].astype(f32) + jnp.dot(
        patches_ref[0], w_vis_ref[...], preferred_element_type=f32)   # [T, D]

    # shared constants (built once, reused by every layer)
    lane_d = jax.lax.broadcasted_iota(jnp.int32, (t, d), 1)
    head0_d = lane_d < D_HEAD                              # head0's model lanes
    row_s = jax.lax.broadcasted_iota(jnp.int32, (t, N_HEADS * t), 0)
    col_s = jax.lax.broadcasted_iota(jnp.int32, (t, N_HEADS * t), 1)
    causal_s = (col_s % t) <= row_s                        # causal per segment
    seg0_s = col_s < t                                     # head0's score lanes
    scale = 1.0 / (D_HEAD ** 0.5)

    def rms(v, w, eps=1e-6):
        ms = jnp.mean(v * v, axis=-1, keepdims=True)
        return v * jax.lax.rsqrt(ms + eps) * w

    # ---- llama-style decoder (static unrolled loop over layers) ------------
    # TODO(synk): LLaMA rotary position embeddings omitted (synthetic weights).
    for l in range(N_LAYERS):
        # fused QKV projection (one MXU push, static lane slices)
        h = rms(x, attn_norm_ref[l]).astype(bf16)
        qkv = jnp.dot(h, wqkv_ref[l], preferred_element_type=f32)     # [T, 3D]
        q = qkv[:, :d]
        k = qkv[:, d:2 * d]
        v = qkv[:, 2 * d:]

        # Packed 2-head attention: keys/values laid out block-diagonally so one
        # matmul gives both heads' scores side by side and one matmul gives
        # both heads' outputs (in their own lanes == concat over heads).
        k_bd = jnp.concatenate(
            [jnp.where(head0_d, k, 0.0), jnp.where(head0_d, 0.0, k)], axis=0
        ).astype(bf16)                                                # [2T, D]
        v_bd = jnp.concatenate(
            [jnp.where(head0_d, v, 0.0), jnp.where(head0_d, 0.0, v)], axis=0
        ).astype(bf16)                                                # [2T, D]

        s = jax.lax.dot_general(
            q.astype(bf16), k_bd, (((1,), (1,)), ((), ())),
            preferred_element_type=f32) * scale                       # [T, 2T]
        s = jnp.where(causal_s, s, neg)

        # segmented softmax (one per 16-lane head block), f32 math
        m0 = jnp.max(jnp.where(seg0_s, s, neg), axis=-1, keepdims=True)
        m1 = jnp.max(jnp.where(seg0_s, neg, s), axis=-1, keepdims=True)
        p = jnp.exp(s - jnp.where(seg0_s, m0, m1))
        l0 = jnp.sum(jnp.where(seg0_s, p, 0.0), axis=-1, keepdims=True)
        l1 = jnp.sum(jnp.where(seg0_s, 0.0, p), axis=-1, keepdims=True)
        p = p * pl.reciprocal(jnp.where(seg0_s, l0, l1), approx=True)

        o = jnp.dot(p.astype(bf16), v_bd, preferred_element_type=f32)  # [T, D]
        x = x + jnp.dot(o.astype(bf16), wo_ref[l], preferred_element_type=f32)

        # fused SwiGLU MLP (W1/W3 packed into one 128-lane RHS)
        h = rms(x, mlp_norm_ref[l]).astype(bf16)
        gu = jnp.dot(h, w13_ref[l], preferred_element_type=f32)      # [T, 2F]
        g = gu[:, :D_FF]
        u = gu[:, D_FF:]
        hid = (g * jax.nn.sigmoid(g)) * u
        x = x + jnp.dot(hid.astype(bf16), w2_ref[l], preferred_element_type=f32)

    # ---- final norm + lm_head (logits never leave VMEM) --------------------
    h = rms(x, final_norm_ref[...]).astype(bf16)
    logits = jnp.dot(h, lm_head_ref[...], preferred_element_type=f32)  # [T, V]

    # ---- shifted CrossEntropyLoss(ignore_index=-200), reduction='mean' -----
    # labels row i holds inputs_tokens[i+1]; row T-1 is IGNORE_INDEX, which
    # reproduces the `[..., :-1, :]` logit shift without slicing.
    labels = labels_ref[0]                                            # [T, 1]
    m = jnp.max(logits, axis=-1, keepdims=True)
    lse = jnp.log(jnp.sum(jnp.exp(logits - m), axis=-1, keepdims=True)) + m
    vcol = jax.lax.broadcasted_iota(jnp.int32, (t, VOCAB), 1)
    onehot = (vcol == labels).astype(f32)
    tgt = jnp.sum(logits * onehot, axis=-1, keepdims=True)
    valid = (labels != IGNORE_INDEX).astype(f32)
    loss = jnp.sum((lse - tgt) * valid) / jnp.maximum(jnp.sum(valid), 1.0)

    # lane-dense scalar writeback (loss broadcast over the 128-lane row)
    loss_ref[...] = loss * jnp.ones((1, 1, 128), f32)


# ------------------------------ pallas wrapper --------------------------------
def _batched_spec(shape):
    nd = len(shape)
    return pl.BlockSpec((1,) + tuple(shape[1:]),
                        lambda b, _nd=nd: (b,) + (0,) * (_nd - 1))


def _shared_spec(shape):
    nd = len(shape)
    return pl.BlockSpec(tuple(shape), lambda b, _nd=nd: (0,) * _nd)


def minigpt_fused_losses(params, patches_b, text_emb_b, labels_b):
    """One pallas_call for B conversations; batch axis is a parallel grid axis.

    Returns the per-conversation (positive) CE losses, shape [B].
    """
    B = patches_b.shape[0]
    data = (patches_b, text_emb_b, labels_b)
    weights = (
        params["w_vis_folded"],
        params["attn_norm"], params["wqkv"], params["wo"],
        params["mlp_norm"], params["w13"], params["w2"],
        params["final_norm"], params["lm_head"],
    )
    out = pl.pallas_call(
        _minigpt_fused_kernel,
        out_shape=jax.ShapeDtypeStruct((B, 1, 128), jnp.float32),
        grid=(B,),
        in_specs=[_batched_spec(x.shape) for x in data]
                 + [_shared_spec(w.shape) for w in weights],
        out_specs=pl.BlockSpec((1, 1, 128), lambda b: (b, 0, 0)),
        compiler_params=pltpu.CompilerParams(
            dimension_semantics=("parallel",)),   # shards conversations on v7x
    )(*data, *weights)
    return out[:, 0, 0]


# ------------------------------ model (glue) ---------------------------------
def init_params(key):
    def dense(k, shape, scale=0.02):
        return scale * jax.random.normal(k, shape, jnp.float32)

    bf16 = jnp.bfloat16
    keys = jax.random.split(key, 4 + 7 * N_LAYERS)
    w_patch = dense(keys[0], (KDIM, VIS_DIM))
    w_vis_proj = dense(keys[1], (VIS_DIM, D_MODEL))
    params = {
        # encode_img matmuls folded once (static weights); bf16 MXU operand.
        "w_vis_folded": jnp.dot(w_patch, w_vis_proj).astype(bf16),
        "tok_emb": dense(keys[2], (VOCAB, D_MODEL)),
        "lm_head": dense(keys[3], (D_MODEL, VOCAB)).astype(bf16),
        "final_norm": jnp.ones((1, D_MODEL), jnp.float32),
        "attn_norm": jnp.ones((N_LAYERS, 1, D_MODEL), jnp.float32),
        "mlp_norm": jnp.ones((N_LAYERS, 1, D_MODEL), jnp.float32),
    }
    wq, wk, wv, wo, w1, w3, w2 = ([] for _ in range(7))
    for l in range(N_LAYERS):
        lk = keys[4 + 7 * l: 4 + 7 * (l + 1)]
        wq.append(dense(lk[0], (D_MODEL, D_MODEL)))
        wk.append(dense(lk[1], (D_MODEL, D_MODEL)))
        wv.append(dense(lk[2], (D_MODEL, D_MODEL)))
        wo.append(dense(lk[3], (D_MODEL, D_MODEL)))
        w1.append(dense(lk[4], (D_MODEL, D_FF)))
        w3.append(dense(lk[5], (D_MODEL, D_FF)))
        w2.append(dense(lk[6], (D_FF, D_MODEL)))
    # fused + bf16-cast layer weights (leading layer axis for the static loop)
    params["wqkv"] = jnp.concatenate(
        [jnp.stack(wq), jnp.stack(wk), jnp.stack(wv)], axis=-1).astype(bf16)
    params["wo"] = jnp.stack(wo).astype(bf16)
    params["w13"] = jnp.concatenate(
        [jnp.stack(w1), jnp.stack(w3)], axis=-1).astype(bf16)
    params["w2"] = jnp.stack(w2).astype(bf16)
    return params


def build_conversations(key):
    # mirrors MiniGPT.__init__: per-conversation tokenized prompt + target,
    # target_len and shift_labels precomputed.
    convs = []
    for _ in range(TRAIN_NUM):
        key, k0, k1 = jax.random.split(key, 3)
        seg0 = jax.random.randint(k0, (1, SEG0_LEN), 0, VOCAB, jnp.int32)
        seg1 = jax.random.randint(k1, (1, SEG1_LEN), 0, VOCAB, jnp.int32)
        inputs_tokens = jnp.concatenate(
            [seg0, jnp.full((1, N_IMG_TOK), IGNORE_INDEX, jnp.int32), seg1],
            axis=1,
        )
        shift_labels = inputs_tokens[..., 1:]                       # [1, T-1]
        # padded to T rows with an extra IGNORE row so the kernel's ignore-mask
        # reproduces the `[..., :-1, :]` logit shift without slicing.
        labels2d = jnp.concatenate(
            [shift_labels.reshape(-1),
             jnp.array([IGNORE_INDEX], jnp.int32)]
        ).reshape(SEQ_LEN, 1)
        convs.append(
            {
                "seg_tokens": (seg0, seg1),
                "target_len": int(inputs_tokens.shape[1]),
                "shift_labels": shift_labels,
                "labels2d": labels2d,
            }
        )
    return convs


def _extract_patches(images):
    # encode_img layout glue: NCHW -> patch-major matrix [num_patches, C*P*P]
    n, c, hh, ww = images.shape
    gh, gw = hh // PATCH, ww // PATCH
    p = images.reshape(n, c, gh, PATCH, gw, PATCH)
    return p.transpose(0, 2, 4, 1, 3, 5).reshape(n * gh * gw, c * PATCH * PATCH)


def _prep_conversation_inputs(params, conv, images):
    """Per-conversation kernel inputs (pure layout glue, no compute hoisting)."""
    # patches placed at the <ImageHere> rows (replaces the in-kernel scatter)
    patches = _extract_patches(images)
    patches_pad = jnp.zeros((SEQ_LEN, KDIM), jnp.float32)
    patches_pad = patches_pad.at[SEG0_LEN:SEG0_LEN + N_IMG_TOK].set(patches)

    # get_context_emb glue: prompt-token embeddings; image rows left zero and
    # filled inside the fused kernel by the vision projection.
    seg0, seg1 = conv["seg_tokens"]
    seg0_emb = jnp.take(params["tok_emb"], seg0[0], axis=0)
    seg1_emb = jnp.take(params["tok_emb"], seg1[0], axis=0)
    text_emb = jnp.concatenate(
        [seg0_emb, jnp.zeros((N_IMG_TOK, D_MODEL), jnp.float32), seg1_emb],
        axis=0,
    )

    # max-length truncation (begin_idx == 0 at this size; mirrors original flow)
    max_new_tokens, max_length = 300, 2000
    begin_idx = max(0, text_emb.shape[0] + max_new_tokens - max_length)
    text_emb = text_emb[begin_idx:]

    return patches_pad.astype(jnp.bfloat16), text_emb, conv["labels2d"]


def minigpt_forward(params, convs, inp):
    """MiniGPT.forward(inp) with inp = (images, k); returns -loss."""
    images, k = inp
    patches_pad, text_emb, labels2d = _prep_conversation_inputs(
        params, convs[k], images)
    # target_len == SEQ_LEN here, so the `logits[:, :target_len]` slice is a
    # no-op and the shift is handled by the IGNORE-padded label row in-kernel.
    losses = minigpt_fused_losses(
        params, patches_pad[None], text_emb[None], labels2d[None])
    return -losses[0]


def minigpt_batched_losses(params, convs, images):
    """All conversations in one pallas_call (batch grid axis, parallel)."""
    prepped = [_prep_conversation_inputs(params, c, images) for c in convs]
    patches_b = jnp.stack([p for p, _, _ in prepped])
    text_b = jnp.stack([t for _, t, _ in prepped])
    labels_b = jnp.stack([lb for _, _, lb in prepped])
    return minigpt_fused_losses(params, patches_b, text_b, labels_b)


# ---------------------------------- main -------------------------------------
if __name__ == "__main__":
    root = jax.random.PRNGKey(0)
    kp, kc, ki = jax.random.split(root, 3)

    params = init_params(kp)
    convs = build_conversations(kc)

    images = jax.random.normal(ki, (1, IMG_C, IMG_HW, IMG_HW), jnp.float32)

    # forward() semantics of the original module: one conversation, -loss.
    out = minigpt_forward(params, convs, (images, 0))
    jax.block_until_ready(out)

    # batched path (all conversations through one parallel-grid pallas_call)
    batched = minigpt_batched_losses(params, convs, images)
    jax.block_until_ready(batched)

    print("KERNEL_OK")
</pallas_src>

<mosaic_0001>
module attributes {stable_mosaic.version = 11 : i64} {
  func.func @_minigpt_fused_kernel(%arg0: i32, %arg1: memref<1x16x192xbf16, #tpu.memory_space<vmem>>, %arg2: memref<1x16x32xf32, #tpu.memory_space<vmem>>, %arg3: memref<1x16x1xi32, #tpu.memory_space<vmem>>, %arg4: memref<192x32xbf16, #tpu.memory_space<vmem>>, %arg5: memref<2x1x32xf32, #tpu.memory_space<vmem>>, %arg6: memref<2x32x96xbf16, #tpu.memory_space<vmem>>, %arg7: memref<2x32x32xbf16, #tpu.memory_space<vmem>>, %arg8: memref<2x1x32xf32, #tpu.memory_space<vmem>>, %arg9: memref<2x32x128xbf16, #tpu.memory_space<vmem>>, %arg10: memref<2x64x32xbf16, #tpu.memory_space<vmem>>, %arg11: memref<1x32xf32, #tpu.memory_space<vmem>>, %arg12: memref<32x128xbf16, #tpu.memory_space<vmem>>, %arg13: memref<1x1x128xf32, #tpu.memory_space<vmem>>) attributes {dimension_semantics = [#tpu.dimension_semantics<parallel>], iteration_bounds = array<i64: 1>, scalar_prefetch = 0 : i64, scratch_operands = 0 : i64, tpu.core_type = #tpu.core_type<tc>, window_params = [{transform_indices = @transform_0, window_bounds = array<i64: 1, 16, 192>}, {transform_indices = @transform_1, window_bounds = array<i64: 1, 16, 32>}, {transform_indices = @transform_2, window_bounds = array<i64: 1, 16, 1>}, {pipeline_mode = #tpu.pipeline_mode<synchronous>, transform_indices = @transform_3, window_bounds = array<i64: 192, 32>}, {pipeline_mode = #tpu.pipeline_mode<synchronous>, transform_indices = @transform_4, window_bounds = array<i64: 2, 1, 32>}, {pipeline_mode = #tpu.pipeline_mode<synchronous>, transform_indices = @transform_5, window_bounds = array<i64: 2, 32, 96>}, {pipeline_mode = #tpu.pipeline_mode<synchronous>, transform_indices = @transform_6, window_bounds = array<i64: 2, 32, 32>}, {pipeline_mode = #tpu.pipeline_mode<synchronous>, transform_indices = @transform_7, window_bounds = array<i64: 2, 1, 32>}, {pipeline_mode = #tpu.pipeline_mode<synchronous>, transform_indices = @transform_8, window_bounds = array<i64: 2, 32, 128>}, {pipeline_mode = #tpu.pipeline_mode<synchronous>, transform_indices = @transform_9, window_bounds = array<i64: 2, 64, 32>}, {pipeline_mode = #tpu.pipeline_mode<synchronous>, transform_indices = @transform_10, window_bounds = array<i64: 1, 32>}, {pipeline_mode = #tpu.pipeline_mode<synchronous>, transform_indices = @transform_11, window_bounds = array<i64: 32, 128>}, {transform_indices = @transform_12, window_bounds = array<i64: 1, 1, 128>}]} {
    %c0 = arith.constant 0 : index
    %c0_0 = arith.constant 0 : index
    %c0_1 = arith.constant 0 : index
    %0 = vector.load %arg2[%c0, %c0_0, %c0_1] : memref<1x16x32xf32, #tpu.memory_space<vmem>>, vector<1x16x32xf32>
    %1 = vector.shape_cast %0 : vector<1x16x32xf32> to vector<16x32xf32>
    %c0_2 = arith.constant 0 : index
    %c0_3 = arith.constant 0 : index
    %c0_4 = arith.constant 0 : index
    %2 = vector.load %arg1[%c0_2, %c0_3, %c0_4] : memref<1x16x192xbf16, #tpu.memory_space<vmem>>, vector<1x16x192xbf16>
    %3 = vector.shape_cast %2 : vector<1x16x192xbf16> to vector<16x192xbf16>
    %c0_5 = arith.constant 0 : index
    %c0_6 = arith.constant 0 : index
    %4 = vector.load %arg4[%c0_5, %c0_6] : memref<192x32xbf16, #tpu.memory_space<vmem>>, vector<192x32xbf16>
    %cst = arith.constant dense<0.000000e+00> : vector<16x32xf32>
    %5 = tpu.matmul %3, %4, %cst {dimension_numbers = #tpu.dot_dimension_numbers<[1], [0], [0], [1], [0, 0, 1, 1], [], []>} : vector<16x192xbf16>, vector<192x32xbf16>, vector<16x32xf32> -> vector<16x32xf32>
    %6 = arith.addf %1, %5 : vector<16x32xf32>
    %7 = tpu.iota {dimensions = array<i32: 1>} : vector<16x32xi32>
    %c16_i32 = arith.constant 16 : i32
    %8 = vector.broadcast %c16_i32 : i32 to vector<16x32xi32>
    %9 = arith.cmpi slt, %7, %8 : vector<16x32xi32>
    %10 = tpu.iota {dimensions = array<i32: 0>} : vector<16x32xi32>
    %11 = tpu.iota {dimensions = array<i32: 1>} : vector<16x32xi32>
    %c16_i32_7 = arith.constant 16 : i32
    %c0_i32 = arith.constant 0 : i32
    %12 = arith.cmpi eq, %c16_i32_7, %c0_i32 : i32
    %c1_i32 = arith.constant 1 : i32
    %13 = arith.select %12, %c1_i32, %c16_i32_7 : i32
    %14 = vector.broadcast %13 : i32 to vector<16x32xi32>
    %15 = arith.remsi %11, %14 : vector<16x32xi32>
    %c0_i32_8 = arith.constant 0 : i32
    %16 = vector.broadcast %c0_i32_8 : i32 to vector<16x32xi32>
    %17 = arith.cmpi ne, %15, %16 : vector<16x32xi32>
    %c0_i32_9 = arith.constant 0 : i32
    %18 = vector.broadcast %c0_i32_9 : i32 to vector<16x32xi32>
    %19 = arith.cmpi slt, %15, %18 : vector<16x32xi32>
    %c0_i32_10 = arith.constant 0 : i32
    %20 = arith.cmpi slt, %13, %c0_i32_10 : i32
    %21 = vector.broadcast %20 : i1 to vector<16x32xi1>
    %22 = vector.broadcast %21 : vector<16x32xi1> to vector<16x32xi1>
    %23 = arith.xori %19, %22 : vector<16x32xi1>
    %24 = arith.andi %23, %17 : vector<16x32xi1>
    %25 = vector.broadcast %13 : i32 to vector<16x32xi32>
    %26 = arith.addi %15, %25 : vector<16x32xi32>
    %27 = arith.select %24, %26, %15 : vector<16x32xi1>, vector<16x32xi32>
    %28 = arith.cmpi sle, %27, %10 : vector<16x32xi32>
    %c16_i32_11 = arith.constant 16 : i32
    %29 = vector.broadcast %c16_i32_11 : i32 to vector<16x32xi32>
    %30 = arith.cmpi slt, %11, %29 : vector<16x32xi32>
    %c0_12 = arith.constant 0 : index
    %c0_13 = arith.constant 0 : index
    %c0_14 = arith.constant 0 : index
    %31 = vector.load %arg5[%c0_12, %c0_13, %c0_14] : memref<2x1x32xf32, #tpu.memory_space<vmem>>, vector<1x1x32xf32>
    %32 = vector.shape_cast %31 : vector<1x1x32xf32> to vector<1x32xf32>
    %33 = arith.mulf %6, %6 : vector<16x32xf32>
    %cst_15 = arith.constant dense<0.000000e+00> : vector<16xf32>
    %34 = vector.multi_reduction <add>, %33, %cst_15 [1] : vector<16x32xf32> to vector<16xf32>
    %35 = vector.shape_cast %34 : vector<16xf32> to vector<16x1xf32>
    %cst_16 = arith.constant 3.200000e+01 : f32
    %36 = vector.broadcast %cst_16 : f32 to vector<16x1xf32>
    %37 = arith.divf %35, %36 : vector<16x1xf32>
    %cst_17 = arith.constant 9.99999997E-7 : f32
    %38 = vector.broadcast %cst_17 : f32 to vector<16x1xf32>
    %39 = arith.addf %37, %38 : vector<16x1xf32>
    %40 = math.rsqrt %39 : vector<16x1xf32>
    %41 = vector.broadcast %40 : vector<16x1xf32> to vector<16x32xf32>
    %42 = arith.mulf %6, %41 : vector<16x32xf32>
    %43 = vector.broadcast %32 : vector<1x32xf32> to vector<16x32xf32>
    %44 = arith.mulf %42, %43 : vector<16x32xf32>
    %45 = arith.truncf %44 : vector<16x32xf32> to vector<16x32xbf16>
    %c0_18 = arith.constant 0 : index
    %c0_19 = arith.constant 0 : index
    %c0_20 = arith.constant 0 : index
    %46 = vector.load %arg6[%c0_18, %c0_19, %c0_20] : memref<2x32x96xbf16, #tpu.memory_space<vmem>>, vector<1x32x96xbf16>
    %47 = vector.shape_cast %46 : vector<1x32x96xbf16> to vector<32x96xbf16>
    %cst_21 = arith.constant dense<0.000000e+00> : vector<16x96xf32>
    %48 = tpu.matmul %45, %47, %cst_21 {dimension_numbers = #tpu.dot_dimension_numbers<[1], [0], [0], [1], [0, 0, 1, 1], [], []>} : vector<16x32xbf16>, vector<32x96xbf16>, vector<16x96xf32> -> vector<16x96xf32>
    %49 = vector.extract_strided_slice %48 {offsets = [0, 0], sizes = [16, 32], strides = [1, 1]} : vector<16x96xf32> to vector<16x32xf32>
    %50 = vector.extract_strided_slice %48 {offsets = [0, 32], sizes = [16, 32], strides = [1, 1]} : vector<16x96xf32> to vector<16x32xf32>
    %51 = vector.extract_strided_slice %48 {offsets = [0, 64], sizes = [16, 32], strides = [1, 1]} : vector<16x96xf32> to vector<16x32xf32>
    %cst_22 = arith.constant 0.000000e+00 : f32
    %52 = vector.broadcast %cst_22 : f32 to vector<16x32xf32>
    %53 = arith.select %9, %50, %52 : vector<16x32xi1>, vector<16x32xf32>
    %cst_23 = arith.constant 0.000000e+00 : f32
    %54 = vector.broadcast %cst_23 : f32 to vector<16x32xf32>
    %55 = arith.select %9, %54, %50 : vector<16x32xi1>, vector<16x32xf32>
    %56 = tpu.concatenate %53, %55 in 0 : vector<16x32xf32>, vector<16x32xf32> -> vector<32x32xf32>
    %57 = arith.truncf %56 : vector<32x32xf32> to vector<32x32xbf16>
    %cst_24 = arith.constant 0.000000e+00 : f32
    %58 = vector.broadcast %cst_24 : f32 to vector<16x32xf32>
    %59 = arith.select %9, %51, %58 : vector<16x32xi1>, vector<16x32xf32>
    %cst_25 = arith.constant 0.000000e+00 : f32
    %60 = vector.broadcast %cst_25 : f32 to vector<16x32xf32>
    %61 = arith.select %9, %60, %51 : vector<16x32xi1>, vector<16x32xf32>
    %62 = tpu.concatenate %59, %61 in 0 : vector<16x32xf32>, vector<16x32xf32> -> vector<32x32xf32>
    %63 = arith.truncf %62 : vector<32x32xf32> to vector<32x32xbf16>
    %64 = arith.truncf %49 : vector<16x32xf32> to vector<16x32xbf16>
    %cst_26 = arith.constant dense<0.000000e+00> : vector<16x32xf32>
    %65 = tpu.matmul %64, %57, %cst_26 {dimension_numbers = #tpu.dot_dimension_numbers<[1], [1], [0], [0], [0, 0, 1, 0], [], []>} : vector<16x32xbf16>, vector<32x32xbf16>, vector<16x32xf32> -> vector<16x32xf32>
    %cst_27 = arith.constant 2.500000e-01 : f32
    %66 = vector.broadcast %cst_27 : f32 to vector<16x32xf32>
    %67 = arith.mulf %65, %66 : vector<16x32xf32>
    %cst_28 = arith.constant -1.000000e+30 : f32
    %68 = vector.broadcast %cst_28 : f32 to vector<16x32xf32>
    %69 = arith.select %28, %67, %68 : vector<16x32xi1>, vector<16x32xf32>
    %cst_29 = arith.constant -1.000000e+30 : f32
    %70 = vector.broadcast %cst_29 : f32 to vector<16x32xf32>
    %71 = arith.select %30, %69, %70 : vector<16x32xi1>, vector<16x32xf32>
    %cst_30 = arith.constant dense<0xFF800000> : vector<16xf32>
    %72 = vector.multi_reduction <maximumf>, %71, %cst_30 [1] : vector<16x32xf32> to vector<16xf32>
    %73 = vector.shape_cast %72 : vector<16xf32> to vector<16x1xf32>
    %cst_31 = arith.constant -1.000000e+30 : f32
    %74 = vector.broadcast %cst_31 : f32 to vector<16x32xf32>
    %75 = arith.select %30, %74, %69 : vector<16x32xi1>, vector<16x32xf32>
    %cst_32 = arith.constant dense<0xFF800000> : vector<16xf32>
    %76 = vector.multi_reduction <maximumf>, %75, %cst_32 [1] : vector<16x32xf32> to vector<16xf32>
    %77 = vector.shape_cast %76 : vector<16xf32> to vector<16x1xf32>
    %78 = vector.shape_cast %73 : vector<16x1xf32> to vector<16x1xf32>
    %79 = vector.broadcast %78 : vector<16x1xf32> to vector<16x32xf32>
    %80 = vector.shape_cast %77 : vector<16x1xf32> to vector<16x1xf32>
    %81 = vector.broadcast %80 : vector<16x1xf32> to vector<16x32xf32>
    %82 = arith.select %30, %79, %81 : vector<16x32xi1>, vector<16x32xf32>
    %83 = arith.subf %69, %82 : vector<16x32xf32>
    %84 = math.exp %83 : vector<16x32xf32>
    %cst_33 = arith.constant 0.000000e+00 : f32
    %85 = vector.broadcast %cst_33 : f32 to vector<16x32xf32>
    %86 = arith.select %30, %84, %85 : vector<16x32xi1>, vector<16x32xf32>
    %cst_34 = arith.constant dense<0.000000e+00> : vector<16xf32>
    %87 = vector.multi_reduction <add>, %86, %cst_34 [1] : vector<16x32xf32> to vector<16xf32>
    %88 = vector.shape_cast %87 : vector<16xf32> to vector<16x1xf32>
    %cst_35 = arith.constant 0.000000e+00 : f32
    %89 = vector.broadcast %cst_35 : f32 to vector<16x32xf32>
    %90 = arith.select %30, %89, %84 : vector<16x32xi1>, vector<16x32xf32>
    %cst_36 = arith.constant dense<0.000000e+00> : vector<16xf32>
    %91 = vector.multi_reduction <add>, %90, %cst_36 [1] : vector<16x32xf32> to vector<16xf32>
    %92 = vector.shape_cast %91 : vector<16xf32> to vector<16x1xf32>
    %93 = vector.shape_cast %88 : vector<16x1xf32> to vector<16x1xf32>
    %94 = vector.broadcast %93 : vector<16x1xf32> to vector<16x32xf32>
    %95 = vector.shape_cast %92 : vector<16x1xf32> to vector<16x1xf32>
    %96 = vector.broadcast %95 : vector<16x1xf32> to vector<16x32xf32>
    %97 = arith.select %30, %94, %96 : vector<16x32xi1>, vector<16x32xf32>
    %98 = tpu.reciprocal %97 {approx = true} : vector<16x32xf32> -> vector<16x32xf32>
    %99 = arith.mulf %84, %98 : vector<16x32xf32>
    %100 = arith.truncf %99 : vector<16x32xf32> to vector<16x32xbf16>
    %cst_37 = arith.constant dense<0.000000e+00> : vector<16x32xf32>
    %101 = tpu.matmul %100, %63, %cst_37 {dimension_numbers = #tpu.dot_dimension_numbers<[1], [0], [0], [1], [0, 0, 1, 1], [], []>} : vector<16x32xbf16>, vector<32x32xbf16>, vector<16x32xf32> -> vector<16x32xf32>
    %102 = arith.truncf %101 : vector<16x32xf32> to vector<16x32xbf16>
    %c0_38 = arith.constant 0 : index
    %c0_39 = arith.constant 0 : index
    %c0_40 = arith.constant 0 : index
    %103 = vector.load %arg7[%c0_38, %c0_39, %c0_40] : memref<2x32x32xbf16, #tpu.memory_space<vmem>>, vector<1x32x32xbf16>
    %104 = vector.shape_cast %103 : vector<1x32x32xbf16> to vector<32x32xbf16>
    %cst_41 = arith.constant dense<0.000000e+00> : vector<16x32xf32>
    %105 = tpu.matmul %102, %104, %cst_41 {dimension_numbers = #tpu.dot_dimension_numbers<[1], [0], [0], [1], [0, 0, 1, 1], [], []>} : vector<16x32xbf16>, vector<32x32xbf16>, vector<16x32xf32> -> vector<16x32xf32>
    %106 = arith.addf %6, %105 : vector<16x32xf32>
    %c0_42 = arith.constant 0 : index
    %c0_43 = arith.constant 0 : index
    %c0_44 = arith.constant 0 : index
    %107 = vector.load %arg8[%c0_42, %c0_43, %c0_44] : memref<2x1x32xf32, #tpu.memory_space<vmem>>, vector<1x1x32xf32>
    %108 = vector.shape_cast %107 : vector<1x1x32xf32> to vector<1x32xf32>
    %109 = arith.mulf %106, %106 : vector<16x32xf32>
    %cst_45 = arith.constant dense<0.000000e+00> : vector<16xf32>
    %110 = vector.multi_reduction <add>, %109, %cst_45 [1] : vector<16x32xf32> to vector<16xf32>
    %111 = vector.shape_cast %110 : vector<16xf32> to vector<16x1xf32>
    %cst_46 = arith.constant 3.200000e+01 : f32
    %112 = vector.broadcast %cst_46 : f32 to vector<16x1xf32>
    %113 = arith.divf %111, %112 : vector<16x1xf32>
    %cst_47 = arith.constant 9.99999997E-7 : f32
    %114 = vector.broadcast %cst_47 : f32 to vector<16x1xf32>
    %115 = arith.addf %113, %114 : vector<16x1xf32>
    %116 = math.rsqrt %115 : vector<16x1xf32>
    %117 = vector.broadcast %116 : vector<16x1xf32> to vector<16x32xf32>
    %118 = arith.mulf %106, %117 : vector<16x32xf32>
    %119 = vector.broadcast %108 : vector<1x32xf32> to vector<16x32xf32>
    %120 = arith.mulf %118, %119 : vector<16x32xf32>
    %121 = arith.truncf %120 : vector<16x32xf32> to vector<16x32xbf16>
    %c0_48 = arith.constant 0 : index
    %c0_49 = arith.constant 0 : index
    %c0_50 = arith.constant 0 : index
    %122 = vector.load %arg9[%c0_48, %c0_49, %c0_50] : memref<2x32x128xbf16, #tpu.memory_space<vmem>>, vector<1x32x128xbf16>
    %123 = vector.shape_cast %122 : vector<1x32x128xbf16> to vector<32x128xbf16>
    %cst_51 = arith.constant dense<0.000000e+00> : vector<16x128xf32>
    %124 = tpu.matmul %121, %123, %cst_51 {dimension_numbers = #tpu.dot_dimension_numbers<[1], [0], [0], [1], [0, 0, 1, 1], [], []>} : vector<16x32xbf16>, vector<32x128xbf16>, vector<16x128xf32> -> vector<16x128xf32>
    %125 = vector.extract_strided_slice %124 {offsets = [0, 0], sizes = [16, 64], strides = [1, 1]} : vector<16x128xf32> to vector<16x64xf32>
    %126 = vector.extract_strided_slice %124 {offsets = [0, 64], sizes = [16, 64], strides = [1, 1]} : vector<16x128xf32> to vector<16x64xf32>
    %127 = arith.negf %125 : vector<16x64xf32>
    %128 = math.exp %127 : vector<16x64xf32>
    %cst_52 = arith.constant 1.000000e+00 : f32
    %129 = vector.broadcast %cst_52 : f32 to vector<16x64xf32>
    %130 = arith.addf %129, %128 : vector<16x64xf32>
    %131 = arith.divf %129, %130 : vector<16x64xf32>
    %132 = arith.mulf %125, %131 : vector<16x64xf32>
    %133 = arith.mulf %132, %126 : vector<16x64xf32>
    %134 = arith.truncf %133 : vector<16x64xf32> to vector<16x64xbf16>
    %c0_53 = arith.constant 0 : index
    %c0_54 = arith.constant 0 : index
    %c0_55 = arith.constant 0 : index
    %135 = vector.load %arg10[%c0_53, %c0_54, %c0_55] : memref<2x64x32xbf16, #tpu.memory_space<vmem>>, vector<1x64x32xbf16>
    %136 = vector.shape_cast %135 : vector<1x64x32xbf16> to vector<64x32xbf16>
    %cst_56 = arith.constant dense<0.000000e+00> : vector<16x32xf32>
    %137 = tpu.matmul %134, %136, %cst_56 {dimension_numbers = #tpu.dot_dimension_numbers<[1], [0], [0], [1], [0, 0, 1, 1], [], []>} : vector<16x64xbf16>, vector<64x32xbf16>, vector<16x32xf32> -> vector<16x32xf32>
    %138 = arith.addf %106, %137 : vector<16x32xf32>
    %c1 = arith.constant 1 : index
    %c0_57 = arith.constant 0 : index
    %c0_58 = arith.constant 0 : index
    %139 = vector.load %arg5[%c1, %c0_57, %c0_58] : memref<2x1x32xf32, #tpu.memory_space<vmem>>, vector<1x1x32xf32>
    %140 = vector.shape_cast %139 : vector<1x1x32xf32> to vector<1x32xf32>
    %141 = arith.mulf %138, %138 : vector<16x32xf32>
    %cst_59 = arith.constant dense<0.000000e+00> : vector<16xf32>
    %142 = vector.multi_reduction <add>, %141, %cst_59 [1] : vector<16x32xf32> to vector<16xf32>
    %143 = vector.shape_cast %142 : vector<16xf32> to vector<16x1xf32>
    %cst_60 = arith.constant 3.200000e+01 : f32
    %144 = vector.broadcast %cst_60 : f32 to vector<16x1xf32>
    %145 = arith.divf %143, %144 : vector<16x1xf32>
    %cst_61 = arith.constant 9.99999997E-7 : f32
    %146 = vector.broadcast %cst_61 : f32 to vector<16x1xf32>
    %147 = arith.addf %145, %146 : vector<16x1xf32>
    %148 = math.rsqrt %147 : vector<16x1xf32>
    %149 = vector.broadcast %148 : vector<16x1xf32> to vector<16x32xf32>
    %150 = arith.mulf %138, %149 : vector<16x32xf32>
    %151 = vector.broadcast %140 : vector<1x32xf32> to vector<16x32xf32>
    %152 = arith.mulf %150, %151 : vector<16x32xf32>
    %153 = arith.truncf %152 : vector<16x32xf32> to vector<16x32xbf16>
    %c1_62 = arith.constant 1 : index
    %c0_63 = arith.constant 0 : index
    %c0_64 = arith.constant 0 : index
    %154 = vector.load %arg6[%c1_62, %c0_63, %c0_64] : memref<2x32x96xbf16, #tpu.memory_space<vmem>>, vector<1x32x96xbf16>
    %155 = vector.shape_cast %154 : vector<1x32x96xbf16> to vector<32x96xbf16>
    %cst_65 = arith.constant dense<0.000000e+00> : vector<16x96xf32>
    %156 = tpu.matmul %153, %155, %cst_65 {dimension_numbers = #tpu.dot_dimension_numbers<[1], [0], [0], [1], [0, 0, 1, 1], [], []>} : vector<16x32xbf16>, vector<32x96xbf16>, vector<16x96xf32> -> vector<16x96xf32>
    %157 = vector.extract_strided_slice %156 {offsets = [0, 0], sizes = [16, 32], strides = [1, 1]} : vector<16x96xf32> to vector<16x32xf32>
    %158 = vector.extract_strided_slice %156 {offsets = [0, 32], sizes = [16, 32], strides = [1, 1]} : vector<16x96xf32> to vector<16x32xf32>
    %159 = vector.extract_strided_slice %156 {offsets = [0, 64], sizes = [16, 32], strides = [1, 1]} : vector<16x96xf32> to vector<16x32xf32>
    %cst_66 = arith.constant 0.000000e+00 : f32
    %160 = vector.broadcast %cst_66 : f32 to vector<16x32xf32>
    %161 = arith.select %9, %158, %160 : vector<16x32xi1>, vector<16x32xf32>
    %cst_67 = arith.constant 0.000000e+00 : f32
    %162 = vector.broadcast %cst_67 : f32 to vector<16x32xf32>
    %163 = arith.select %9, %162, %158 : vector<16x32xi1>, vector<16x32xf32>
    %164 = tpu.concatenate %161, %163 in 0 : vector<16x32xf32>, vector<16x32xf32> -> vector<32x32xf32>
    %165 = arith.truncf %164 : vector<32x32xf32> to vector<32x32xbf16>
    %cst_68 = arith.constant 0.000000e+00 : f32
    %166 = vector.broadcast %cst_68 : f32 to vector<16x32xf32>
    %167 = arith.select %9, %159, %166 : vector<16x32xi1>, vector<16x32xf32>
    %cst_69 = arith.constant 0.000000e+00 : f32
    %168 = vector.broadcast %cst_69 : f32 to vector<16x32xf32>
    %169 = arith.select %9, %168, %159 : vector<16x32xi1>, vector<16x32xf32>
    %170 = tpu.concatenate %167, %169 in 0 : vector<16x32xf32>, vector<16x32xf32> -> vector<32x32xf32>
    %171 = arith.truncf %170 : vector<32x32xf32> to vector<32x32xbf16>
    %172 = arith.truncf %157 : vector<16x32xf32> to vector<16x32xbf16>
    %cst_70 = arith.constant dense<0.000000e+00> : vector<16x32xf32>
    %173 = tpu.matmul %172, %165, %cst_70 {dimension_numbers = #tpu.dot_dimension_numbers<[1], [1], [0], [0], [0, 0, 1, 0], [], []>} : vector<16x32xbf16>, vector<32x32xbf16>, vector<16x32xf32> -> vector<16x32xf32>
    %cst_71 = arith.constant 2.500000e-01 : f32
    %174 = vector.broadcast %cst_71 : f32 to vector<16x32xf32>
    %175 = arith.mulf %173, %174 : vector<16x32xf32>
    %cst_72 = arith.constant -1.000000e+30 : f32
    %176 = vector.broadcast %cst_72 : f32 to vector<16x32xf32>
    %177 = arith.select %28, %175, %176 : vector<16x32xi1>, vector<16x32xf32>
    %cst_73 = arith.constant -1.000000e+30 : f32
    %178 = vector.broadcast %cst_73 : f32 to vector<16x32xf32>
    %179 = arith.select %30, %177, %178 : vector<16x32xi1>, vector<16x32xf32>
    %cst_74 = arith.constant dense<0xFF800000> : vector<16xf32>
    %180 = vector.multi_reduction <maximumf>, %179, %cst_74 [1] : vector<16x32xf32> to vector<16xf32>
    %181 = vector.shape_cast %180 : vector<16xf32> to vector<16x1xf32>
    %cst_75 = arith.constant -1.000000e+30 : f32
    %182 = vector.broadcast %cst_75 : f32 to vector<16x32xf32>
    %183 = arith.select %30, %182, %177 : vector<16x32xi1>, vector<16x32xf32>
    %cst_76 = arith.constant dense<0xFF800000> : vector<16xf32>
    %184 = vector.multi_reduction <maximumf>, %183, %cst_76 [1] : vector<16x32xf32> to vector<16xf32>
    %185 = vector.shape_cast %184 : vector<16xf32> to vector<16x1xf32>
    %186 = vector.shape_cast %181 : vector<16x1xf32> to vector<16x1xf32>
    %187 = vector.broadcast %186 : vector<16x1xf32> to vector<16x32xf32>
    %188 = vector.shape_cast %185 : vector<16x1xf32> to vector<16x1xf32>
    %189 = vector.broadcast %188 : vector<16x1xf32> to vector<16x32xf32>
    %190 = arith.select %30, %187, %189 : vector<16x32xi1>, vector<16x32xf32>
    %191 = arith.subf %177, %190 : vector<16x32xf32>
    %192 = math.exp %191 : vector<16x32xf32>
    %cst_77 = arith.constant 0.000000e+00 : f32
    %193 = vector.broadcast %cst_77 : f32 to vector<16x32xf32>
    %194 = arith.select %30, %192, %193 : vector<16x32xi1>, vector<16x32xf32>
    %cst_78 = arith.constant dense<0.000000e+00> : vector<16xf32>
    %195 = vector.multi_reduction <add>, %194, %cst_78 [1] : vector<16x32xf32> to vector<16xf32>
    %196 = vector.shape_cast %195 : vector<16xf32> to vector<16x1xf32>
    %cst_79 = arith.constant 0.000000e+00 : f32
    %197 = vector.broadcast %cst_79 : f32 to vector<16x32xf32>
    %198 = arith.select %30, %197, %192 : vector<16x32xi1>, vector<16x32xf32>
    %cst_80 = arith.constant dense<0.000000e+00> : vector<16xf32>
    %199 = vector.multi_reduction <add>, %198, %cst_80 [1] : vector<16x32xf32> to vector<16xf32>
    %200 = vector.shape_cast %199 : vector<16xf32> to vector<16x1xf32>
    %201 = vector.shape_cast %196 : vector<16x1xf32> to vector<16x1xf32>
    %202 = vector.broadcast %201 : vector<16x1xf32> to vector<16x32xf32>
    %203 = vector.shape_cast %200 : vector<16x1xf32> to vector<16x1xf32>
    %204 = vector.broadcast %203 : vector<16x1xf32> to vector<16x32xf32>
    %205 = arith.select %30, %202, %204 : vector<16x32xi1>, vector<16x32xf32>
    %206 = tpu.reciprocal %205 {approx = true} : vector<16x32xf32> -> vector<16x32xf32>
    %207 = arith.mulf %192, %206 : vector<16x32xf32>
    %208 = arith.truncf %207 : vector<16x32xf32> to vector<16x32xbf16>
    %cst_81 = arith.constant dense<0.000000e+00> : vector<16x32xf32>
    %209 = tpu.matmul %208, %171, %cst_81 {dimension_numbers = #tpu.dot_dimension_numbers<[1], [0], [0], [1], [0, 0, 1, 1], [], []>} : vector<16x32xbf16>, vector<32x32xbf16>, vector<16x32xf32> -> vector<16x32xf32>
    %210 = arith.truncf %209 : vector<16x32xf32> to vector<16x32xbf16>
    %c1_82 = arith.constant 1 : index
    %c0_83 = arith.constant 0 : index
    %c0_84 = arith.constant 0 : index
    %211 = vector.load %arg7[%c1_82, %c0_83, %c0_84] : memref<2x32x32xbf16, #tpu.memory_space<vmem>>, vector<1x32x32xbf16>
    %212 = vector.shape_cast %211 : vector<1x32x32xbf16> to vector<32x32xbf16>
    %cst_85 = arith.constant dense<0.000000e+00> : vector<16x32xf32>
    %213 = tpu.matmul %210, %212, %cst_85 {dimension_numbers = #tpu.dot_dimension_numbers<[1], [0], [0], [1], [0, 0, 1, 1], [], []>} : vector<16x32xbf16>, vector<32x32xbf16>, vector<16x32xf32> -> vector<16x32xf32>
    %214 = arith.addf %138, %213 : vector<16x32xf32>
    %c1_86 = arith.constant 1 : index
    %c0_87 = arith.constant 0 : index
    %c0_88 = arith.constant 0 : index
    %215 = vector.load %arg8[%c1_86, %c0_87, %c0_88] : memref<2x1x32xf32, #tpu.memory_space<vmem>>, vector<1x1x32xf32>
    %216 = vector.shape_cast %215 : vector<1x1x32xf32> to vector<1x32xf32>
    %217 = arith.mulf %214, %214 : vector<16x32xf32>
    %cst_89 = arith.constant dense<0.000000e+00> : vector<16xf32>
    %218 = vector.multi_reduction <add>, %217, %cst_89 [1] : vector<16x32xf32> to vector<16xf32>
    %219 = vector.shape_cast %218 : vector<16xf32> to vector<16x1xf32>
    %cst_90 = arith.constant 3.200000e+01 : f32
    %220 = vector.broadcast %cst_90 : f32 to vector<16x1xf32>
    %221 = arith.divf %219, %220 : vector<16x1xf32>
    %cst_91 = arith.constant 9.99999997E-7 : f32
    %222 = vector.broadcast %cst_91 : f32 to vector<16x1xf32>
    %223 = arith.addf %221, %222 : vector<16x1xf32>
    %224 = math.rsqrt %223 : vector<16x1xf32>
    %225 = vector.broadcast %224 : vector<16x1xf32> to vector<16x32xf32>
    %226 = arith.mulf %214, %225 : vector<16x32xf32>
    %227 = vector.broadcast %216 : vector<1x32xf32> to vector<16x32xf32>
    %228 = arith.mulf %226, %227 : vector<16x32xf32>
    %229 = arith.truncf %228 : vector<16x32xf32> to vector<16x32xbf16>
    %c1_92 = arith.constant 1 : index
    %c0_93 = arith.constant 0 : index
    %c0_94 = arith.constant 0 : index
    %230 = vector.load %arg9[%c1_92, %c0_93, %c0_94] : memref<2x32x128xbf16, #tpu.memory_space<vmem>>, vector<1x32x128xbf16>
    %231 = vector.shape_cast %230 : vector<1x32x128xbf16> to vector<32x128xbf16>
    %cst_95 = arith.constant dense<0.000000e+00> : vector<16x128xf32>
    %232 = tpu.matmul %229, %231, %cst_95 {dimension_numbers = #tpu.dot_dimension_numbers<[1], [0], [0], [1], [0, 0, 1, 1], [], []>} : vector<16x32xbf16>, vector<32x128xbf16>, vector<16x128xf32> -> vector<16x128xf32>
    %233 = vector.extract_strided_slice %232 {offsets = [0, 0], sizes = [16, 64], strides = [1, 1]} : vector<16x128xf32> to vector<16x64xf32>
    %234 = vector.extract_strided_slice %232 {offsets = [0, 64], sizes = [16, 64], strides = [1, 1]} : vector<16x128xf32> to vector<16x64xf32>
    %235 = arith.negf %233 : vector<16x64xf32>
    %236 = math.exp %235 : vector<16x64xf32>
    %cst_96 = arith.constant 1.000000e+00 : f32
    %237 = vector.broadcast %cst_96 : f32 to vector<16x64xf32>
    %238 = arith.addf %237, %236 : vector<16x64xf32>
    %239 = arith.divf %237, %238 : vector<16x64xf32>
    %240 = arith.mulf %233, %239 : vector<16x64xf32>
    %241 = arith.mulf %240, %234 : vector<16x64xf32>
    %242 = arith.truncf %241 : vector<16x64xf32> to vector<16x64xbf16>
    %c1_97 = arith.constant 1 : index
    %c0_98 = arith.constant 0 : index
    %c0_99 = arith.constant 0 : index
    %243 = vector.load %arg10[%c1_97, %c0_98, %c0_99] : memref<2x64x32xbf16, #tpu.memory_space<vmem>>, vector<1x64x32xbf16>
    %244 = vector.shape_cast %243 : vector<1x64x32xbf16> to vector<64x32xbf16>
    %cst_100 = arith.constant dense<0.000000e+00> : vector<16x32xf32>
    %245 = tpu.matmul %242, %244, %cst_100 {dimension_numbers = #tpu.dot_dimension_numbers<[1], [0], [0], [1], [0, 0, 1, 1], [], []>} : vector<16x64xbf16>, vector<64x32xbf16>, vector<16x32xf32> -> vector<16x32xf32>
    %246 = arith.addf %214, %245 : vector<16x32xf32>
    %c0_101 = arith.constant 0 : index
    %c0_102 = arith.constant 0 : index
    %247 = vector.load %arg11[%c0_101, %c0_102] : memref<1x32xf32, #tpu.memory_space<vmem>>, vector<1x32xf32>
    %248 = arith.mulf %246, %246 : vector<16x32xf32>
    %cst_103 = arith.constant dense<0.000000e+00> : vector<16xf32>
    %249 = vector.multi_reduction <add>, %248, %cst_103 [1] : vector<16x32xf32> to vector<16xf32>
    %250 = vector.shape_cast %249 : vector<16xf32> to vector<16x1xf32>
    %cst_104 = arith.constant 3.200000e+01 : f32
    %251 = vector.broadcast %cst_104 : f32 to vector<16x1xf32>
    %252 = arith.divf %250, %251 : vector<16x1xf32>
    %cst_105 = arith.constant 9.99999997E-7 : f32
    %253 = vector.broadcast %cst_105 : f32 to vector<16x1xf32>
    %254 = arith.addf %252, %253 : vector<16x1xf32>
    %255 = math.rsqrt %254 : vector<16x1xf32>
    %256 = vector.broadcast %255 : vector<16x1xf32> to vector<16x32xf32>
    %257 = arith.mulf %246, %256 : vector<16x32xf32>
    %258 = vector.broadcast %247 : vector<1x32xf32> to vector<16x32xf32>
    %259 = arith.mulf %257, %258 : vector<16x32xf32>
    %260 = arith.truncf %259 : vector<16x32xf32> to vector<16x32xbf16>
    %c0_106 = arith.constant 0 : index
    %c0_107 = arith.constant 0 : index
    %261 = vector.load %arg12[%c0_106, %c0_107] : memref<32x128xbf16, #tpu.memory_space<vmem>>, vector<32x128xbf16>
    %cst_108 = arith.constant dense<0.000000e+00> : vector<16x128xf32>
    %262 = tpu.matmul %260, %261, %cst_108 {dimension_numbers = #tpu.dot_dimension_numbers<[1], [0], [0], [1], [0, 0, 1, 1], [], []>} : vector<16x32xbf16>, vector<32x128xbf16>, vector<16x128xf32> -> vector<16x128xf32>
    %c0_109 = arith.constant 0 : index
    %c0_110 = arith.constant 0 : index
    %c0_111 = arith.constant 0 : index
    %263 = vector.load %arg3[%c0_109, %c0_110, %c0_111] : memref<1x16x1xi32, #tpu.memory_space<vmem>>, vector<1x16x1xi32>
    %264 = vector.shape_cast %263 : vector<1x16x1xi32> to vector<16x1xi32>
    %cst_112 = arith.constant dense<0xFF800000> : vector<16xf32>
    %265 = vector.multi_reduction <maximumf>, %262, %cst_112 [1] : vector<16x128xf32> to vector<16xf32>
    %266 = vector.shape_cast %265 : vector<16xf32> to vector<16x1xf32>
    %267 = vector.broadcast %266 : vector<16x1xf32> to vector<16x128xf32>
    %268 = arith.subf %262, %267 : vector<16x128xf32>
    %269 = math.exp %268 : vector<16x128xf32>
    %cst_113 = arith.constant dense<0.000000e+00> : vector<16xf32>
    %270 = vector.multi_reduction <add>, %269, %cst_113 [1] : vector<16x128xf32> to vector<16xf32>
    %271 = vector.shape_cast %270 : vector<16xf32> to vector<16x1xf32>
    %272 = math.log %271 : vector<16x1xf32>
    %273 = arith.addf %272, %266 : vector<16x1xf32>
    %274 = tpu.iota {dimensions = array<i32: 1>} : vector<16x128xi32>
    %275 = vector.broadcast %264 : vector<16x1xi32> to vector<16x128xi32>
    %276 = arith.cmpi eq, %274, %275 : vector<16x128xi32>
    %277 = arith.extui %276 : vector<16x128xi1> to vector<16x128xi32>
    %278 = arith.sitofp %277 : vector<16x128xi32> to vector<16x128xf32>
    %279 = arith.mulf %262, %278 : vector<16x128xf32>
    %cst_114 = arith.constant dense<0.000000e+00> : vector<16xf32>
    %280 = vector.multi_reduction <add>, %279, %cst_114 [1] : vector<16x128xf32> to vector<16xf32>
    %281 = vector.shape_cast %280 : vector<16xf32> to vector<16x1xf32>
    %c-200_i32 = arith.constant -200 : i32
    %282 = vector.broadcast %c-200_i32 : i32 to vector<16x1xi32>
    %283 = arith.cmpi ne, %264, %282 : vector<16x1xi32>
    %284 = arith.extui %283 : vector<16x1xi1> to vector<16x1xi32>
    %285 = arith.sitofp %284 : vector<16x1xi32> to vector<16x1xf32>
    %286 = arith.subf %273, %281 : vector<16x1xf32>
    %287 = arith.mulf %286, %285 : vector<16x1xf32>
    %288 = vector.shape_cast %287 : vector<16x1xf32> to vector<1x16x1xf32>
    %cst_115 = arith.constant dense<0.000000e+00> : vector<1xf32>
    %289 = vector.multi_reduction <add>, %288, %cst_115 [1, 2] : vector<1x16x1xf32> to vector<1xf32>
    %290 = vector.shape_cast %289 : vector<1xf32> to vector<1x1x1xf32>
    %291 = vector.extract %290[0, 0, 0] : f32 from vector<1x1x1xf32>
    %292 = vector.shape_cast %285 : vector<16x1xf32> to vector<1x16x1xf32>
    %cst_116 = arith.constant dense<0.000000e+00> : vector<1xf32>
    %293 = vector.multi_reduction <add>, %292, %cst_116 [1, 2] : vector<1x16x1xf32> to vector<1xf32>
    %294 = vector.shape_cast %293 : vector<1xf32> to vector<1x1x1xf32>
    %295 = vector.extract %294[0, 0, 0] : f32 from vector<1x1x1xf32>
    %cst_117 = arith.constant 1.000000e+00 : f32
    %296 = arith.maximumf %295, %cst_117 : f32
    %297 = arith.divf %291, %296 : f32
    %cst_118 = arith.constant 1.000000e+00 : f32
    %298 = vector.broadcast %cst_118 : f32 to vector<1x1x128xf32>
    %299 = vector.broadcast %297 : f32 to vector<1x1x128xf32>
    %300 = arith.mulf %299, %298 : vector<1x1x128xf32>
    %c0_119 = arith.constant 0 : index
    %c0_120 = arith.constant 0 : index
    %c0_121 = arith.constant 0 : index
    %301 = vector.load %arg13[%c0_119, %c0_120, %c0_121] : memref<1x1x128xf32, #tpu.memory_space<vmem>>, vector<1x1x128xf32>
    tpu.vector_store %arg13[%c0_119, %c0_120, %c0_121], %300 {strides = array<i32>} : memref<1x1x128xf32, #tpu.memory_space<vmem>>, vector<1x1x128xf32>,
    return
  }
  func.func @transform_0(%arg0: i32) -> (i32, i32, i32) {
    %c0_i32 = arith.constant 0 : i32
    %c0_i32_0 = arith.constant 0 : i32
    %c0_i32_1 = arith.constant 0 : i32
    return %arg0, %c0_i32, %c0_i32_0 : i32, i32, i32
  }
  func.func @transform_1(%arg0: i32) -> (i32, i32, i32) {
    %c0_i32 = arith.constant 0 : i32
    %c0_i32_0 = arith.constant 0 : i32
    %c0_i32_1 = arith.constant 0 : i32
    return %arg0, %c0_i32, %c0_i32_0 : i32, i32, i32
  }
  func.func @transform_2(%arg0: i32) -> (i32, i32, i32) {
    %c0_i32 = arith.constant 0 : i32
    %c0_i32_0 = arith.constant 0 : i32
    %c0_i32_1 = arith.constant 0 : i32
    return %arg0, %c0_i32, %c0_i32_0 : i32, i32, i32
  }
  func.func @transform_3(%arg0: i32) -> (i32, i32) {
    %c0_i32 = arith.constant 0 : i32
    %c0_i32_0 = arith.constant 0 : i32
    %c0_i32_1 = arith.constant 0 : i32
    return %c0_i32, %c0_i32_0 : i32, i32
  }
  func.func @transform_4(%arg0: i32) -> (i32, i32, i32) {
    %c0_i32 = arith.constant 0 : i32
    %c0_i32_0 = arith.constant 0 : i32
    %c0_i32_1 = arith.constant 0 : i32
    %c0_i32_2 = arith.constant 0 : i32
    return %c0_i32, %c0_i32_0, %c0_i32_1 : i32, i32, i32
  }
  func.func @transform_5(%arg0: i32) -> (i32, i32, i32) {
    %c0_i32 = arith.constant 0 : i32
    %c0_i32_0 = arith.constant 0 : i32
    %c0_i32_1 = arith.constant 0 : i32
    %c0_i32_2 = arith.constant 0 : i32
    return %c0_i32, %c0_i32_0, %c0_i32_1 : i32, i32, i32
  }
  func.func @transform_6(%arg0: i32) -> (i32, i32, i32) {
    %c0_i32 = arith.constant 0 : i32
    %c0_i32_0 = arith.constant 0 : i32
    %c0_i32_1 = arith.constant 0 : i32
    %c0_i32_2 = arith.constant 0 : i32
    return %c0_i32, %c0_i32_0, %c0_i32_1 : i32, i32, i32
  }
  func.func @transform_7(%arg0: i32) -> (i32, i32, i32) {
    %c0_i32 = arith.constant 0 : i32
    %c0_i32_0 = arith.constant 0 : i32
    %c0_i32_1 = arith.constant 0 : i32
    %c0_i32_2 = arith.constant 0 : i32
    return %c0_i32, %c0_i32_0, %c0_i32_1 : i32, i32, i32
  }
  func.func @transform_8(%arg0: i32) -> (i32, i32, i32) {
    %c0_i32 = arith.constant 0 : i32
    %c0_i32_0 = arith.constant 0 : i32
    %c0_i32_1 = arith.constant 0 : i32
    %c0_i32_2 = arith.constant 0 : i32
    return %c0_i32, %c0_i32_0, %c0_i32_1 : i32, i32, i32
  }
  func.func @transform_9(%arg0: i32) -> (i32, i32, i32) {
    %c0_i32 = arith.constant 0 : i32
    %c0_i32_0 = arith.constant 0 : i32
    %c0_i32_1 = arith.constant 0 : i32
    %c0_i32_2 = arith.constant 0 : i32
    return %c0_i32, %c0_i32_0, %c0_i32_1 : i32, i32, i32
  }
  func.func @transform_10(%arg0: i32) -> (i32, i32) {
    %c0_i32 = arith.constant 0 : i32
    %c0_i32_0 = arith.constant 0 : i32
    %c0_i32_1 = arith.constant 0 : i32
    return %c0_i32, %c0_i32_0 : i32, i32
  }
  func.func @transform_11(%arg0: i32) -> (i32, i32) {
    %c0_i32 = arith.constant 0 : i32
    %c0_i32_0 = arith.constant 0 : i32
    %c0_i32_1 = arith.constant 0 : i32
    return %c0_i32, %c0_i32_0 : i32, i32
  }
  func.func @transform_12(%arg0: i32) -> (i32, i32, i32) {
    %c0_i32 = arith.constant 0 : i32
    %c0_i32_0 = arith.constant 0 : i32
    %c0_i32_1 = arith.constant 0 : i32
    return %arg0, %c0_i32, %c0_i32_0 : i32, i32, i32
  }
}

</mosaic_0001>

<llo_original>
// kernel: tpu_custom_call.1
$region0: #{tpu_custom_call.1}
  #allocation0 [shape = 'u32[]', space=smem, size = 0x4, offset = 0x4, fixed_abs, tag = 'smem constant byte address 0x4 - core index']
  #allocation1 [shape = 'u32[144,128]{1,0:T(1,128)}', space=vmem, size = 0x12000, scoped, tag = 'internal scratch']
  %s0 = inlined_call_operand.vmem [shape: bf16[1,16,192], index: 0, kind: input, shape index: {}]
  %s1 = inlined_call_operand.vmem [shape: f32[1,16,32], index: 1, kind: input, shape index: {}]
  %s2 = inlined_call_operand.vmem [shape: s32[1,16,1], index: 2, kind: input, shape index: {}]
  %s3 = inlined_call_operand.vmem [shape: bf16[192,32], index: 3, kind: input, shape index: {}]
  %s4 = inlined_call_operand.vmem [shape: f32[2,1,32], index: 4, kind: input, shape index: {}]
  %s5 = inlined_call_operand.vmem [shape: bf16[2,32,96], index: 5, kind: input, shape index: {}]
  %s6 = inlined_call_operand.vmem [shape: bf16[2,32,32], index: 6, kind: input, shape index: {}]
  %s7 = inlined_call_operand.vmem [shape: f32[2,1,32], index: 7, kind: input, shape index: {}]
  %s8 = inlined_call_operand.vmem [shape: bf16[2,32,128], index: 8, kind: input, shape index: {}]
  %s9 = inlined_call_operand.vmem [shape: bf16[2,64,32], index: 9, kind: input, shape index: {}]
  %s10 = inlined_call_operand.vmem [shape: f32[1,32], index: 10, kind: input, shape index: {}]
  %s11 = inlined_call_operand.vmem [shape: bf16[32,128], index: 11, kind: input, shape index: {}]
  %s12 = inlined_call_operand.hbm [shape: f32[1,1,128], index: 12, kind: output, shape index: {}]
  %s13 = sld [smem:[#allocation0]]
  $region58: #{tpu_custom_call.1} parent=0
    _
  %s15 = ssub.s32 1, %s13
  %s16 = scalar_select 0, %s15, %s13
  $region1: #{tpu_custom_call.1} parent=0
    #allocation2 [shape = 'u8[512]{0}', space=vmem, size = 0x400, scoped, tag = 'output window, operand 0, single buffered']
    #allocation3 [shape = 's32[1]{0}', space=sflag, size = 0x4, scoped, tag = 'scoped memory for tpu_custom_call.1']
    %17 = vsyncpa [#allocation3], 0
    // Predicated region
    $region2: #{tpu_custom_call.1} parent=1 // pred_check
      _
    $region3: #{tpu_custom_call.1} parent=1 // pred_check_branch
      %19 = sbr.rel (0) target = $region5
    $region4: #{tpu_custom_call.1} parent=1 // pred_region
      _
    $region5: #{tpu_custom_call.1} parent=1 // pred_fallthru
      _
    // Predicated region
    $region6: #{tpu_custom_call.1} parent=1 // pred_check
      _
    $region7: #{tpu_custom_call.1} parent=1 // pred_check_branch
      %21 = sbr.rel (0) target = $region9
    $region8: #{tpu_custom_call.1} parent=1 // pred_region
      _
    $region9: #{tpu_custom_call.1} parent=1 // pred_fallthru
      _
    // Predicated region
    $region10: #{tpu_custom_call.1} parent=1 // pred_check
      _
    $region11: #{tpu_custom_call.1} parent=1 // pred_check_branch
      %23 = sbr.rel (0) target = $region13
    $region12: #{tpu_custom_call.1} parent=1 // pred_region
      _
    $region13: #{tpu_custom_call.1} parent=1 // pred_fallthru
      _
    // Predicated region
    $region14: #{tpu_custom_call.1} parent=1 // pred_check
      _
    $region15: #{tpu_custom_call.1} parent=1 // pred_check_branch
      %25 = sbr.rel (0) target = $region17
    $region16: #{tpu_custom_call.1} parent=1 // pred_region
      _
    $region17: #{tpu_custom_call.1} parent=1 // pred_fallthru
      _
    // Predicated region
    $region18: #{tpu_custom_call.1} parent=1 // pred_check
      _
    $region19: #{tpu_custom_call.1} parent=1 // pred_check_branch
      %27 = sbr.rel (0) target = $region21
    $region20: #{tpu_custom_call.1} parent=1 // pred_region
      _
    $region21: #{tpu_custom_call.1} parent=1 // pred_fallthru
      _
    // Predicated region
    $region22: #{tpu_custom_call.1} parent=1 // pred_check
      _
    $region23: #{tpu_custom_call.1} parent=1 // pred_check_branch
      %29 = sbr.rel (0) target = $region25
    $region24: #{tpu_custom_call.1} parent=1 // pred_region
      _
    $region25: #{tpu_custom_call.1} parent=1 // pred_fallthru
      _
    // Predicated region
    $region26: #{tpu_custom_call.1} parent=1 // pred_check
      _
    $region27: #{tpu_custom_call.1} parent=1 // pred_check_branch
      %31 = sbr.rel (0) target = $region29
    $region28: #{tpu_custom_call.1} parent=1 // pred_region
      _
    $region29: #{tpu_custom_call.1} parent=1 // pred_fallthru
      _
    // Predicated region
    $region30: #{tpu_custom_call.1} parent=1 // pred_check
      _
    $region31: #{tpu_custom_call.1} parent=1 // pred_check_branch
      %33 = sbr.rel (0) target = $region33
    $region32: #{tpu_custom_call.1} parent=1 // pred_region
      _
    $region33: #{tpu_custom_call.1} parent=1 // pred_fallthru
      _
    // Predicated region
    $region34: #{tpu_custom_call.1} parent=1 // pred_check
      _
    $region35: #{tpu_custom_call.1} parent=1 // pred_check_branch
      %35 = sbr.rel (0) target = $region37
    $region36: #{tpu_custom_call.1} parent=1 // pred_region
      _
    $region37: #{tpu_custom_call.1} parent=1 // pred_fallthru
      _
    // Predicated region
    $region38: #{tpu_custom_call.1} parent=1 // pred_check
      _
    $region39: #{tpu_custom_call.1} parent=1 // pred_check_branch
      %37 = sbr.rel (0) target = $region41
    $region40: #{tpu_custom_call.1} parent=1 // pred_region
      _
    $region41: #{tpu_custom_call.1} parent=1 // pred_fallthru
      _
    // Predicated region
    $region42: #{tpu_custom_call.1} parent=1 // pred_check
      _
    $region43: #{tpu_custom_call.1} parent=1 // pred_check_branch
      %39 = sbr.rel (0) target = $region45
    $region44: #{tpu_custom_call.1} parent=1 // pred_region
      _
    $region45: #{tpu_custom_call.1} parent=1 // pred_fallthru
      _
    // Predicated region
    $region46: #{tpu_custom_call.1} parent=1 // pred_check
      _
    $region47: #{tpu_custom_call.1} parent=1 // pred_check_branch
      %41 = sbr.rel (0) target = $region49
    $region48: #{tpu_custom_call.1} parent=1 // pred_region
      _
    $region49: #{tpu_custom_call.1} parent=1 // pred_fallthru
      _
    %v43 = vld [vmem:[%s1] sm:$0xff]
    %v44 = vld [vmem:[%s1 + $0x8] sm:$0xff]
    %v45 = vld [vmem:[%s0] sm:$0xff]
    %v46 = vld [vmem:[%s0 + $0x8] sm:$0xff]
    %v47 = vld [vmem:[%s3] sm:$0xf]
    %v48 = vld [vmem:[%s3 + $0x4] sm:$0xf]
    %v49 = vld [vmem:[%s3 + $0x8] sm:$0xf]
    %v50 = vld [vmem:[%s3 + $0xc] sm:$0xf]
    %v51 = vld [vmem:[%s3 + $0x10] sm:$0xf]
    %v52 = vld [vmem:[%s3 + $0x14] sm:$0xf]
    %v53 = vld [vmem:[%s3 + $0x18] sm:$0xf]
    %v54 = vld [vmem:[%s3 + $0x1c] sm:$0xf]
    %v55 = vld [vmem:[%s3 + $0x20] sm:$0xf]
    %v56 = vld [vmem:[%s3 + $0x24] sm:$0xf]
    %v57 = vld [vmem:[%s3 + $0x28] sm:$0xf]
    %v58 = vld [vmem:[%s3 + $0x2c] sm:$0xf]
    %v59 = vld [vmem:[%s3 + $0x30] sm:$0xf]
    %v60 = vld [vmem:[%s3 + $0x34] sm:$0xf]
    %v61 = vld [vmem:[%s3 + $0x38] sm:$0xf]
    %v62 = vld [vmem:[%s3 + $0x3c] sm:$0xf]
    %v63 = vld [vmem:[%s3 + $0x40] sm:$0xf]
    %v64 = vld [vmem:[%s3 + $0x44] sm:$0xf]
    %v65 = vld [vmem:[%s3 + $0x48] sm:$0xf]
    %v66 = vld [vmem:[%s3 + $0x4c] sm:$0xf]
    %v67 = vld [vmem:[%s3 + $0x50] sm:$0xf]
    %v68 = vld [vmem:[%s3 + $0x54] sm:$0xf]
    %v69 = vld [vmem:[%s3 + $0x58] sm:$0xf]
    %v70 = vld [vmem:[%s3 + $0x5c] sm:$0xf]
    %v73 = vunpack.c.l.b16 %v45
    %v74 = vunpack.c.h.b16 %v45
    %v75 = vunpack.c.l.b16 %v46
    %v76 = vunpack.c.h.b16 %v46
    %v77 = vpack.c.b16 %v75, %v73
    %v78 = vpack.c.b16 %v76, %v74
    %v104 = vunpack.c.l.b16 %v47
    %v105 = vunpack.c.l.b16 %v48
    %v106 = vunpack.c.l.b16 %v49
    %v107 = vunpack.c.l.b16 %v50
    %v108 = vunpack.c.l.b16 %v51
    %v109 = vunpack.c.l.b16 %v52
    %v110 = vunpack.c.l.b16 %v53
    %v111 = vunpack.c.l.b16 %v54
    %v112 = vunpack.c.l.b16 %v55
    %v113 = vunpack.c.l.b16 %v56
    %v114 = vunpack.c.l.b16 %v57
    %v115 = vunpack.c.l.b16 %v58
    %v116 = vunpack.c.l.b16 %v59
    %v117 = vunpack.c.l.b16 %v60
    %v118 = vunpack.c.l.b16 %v61
    %v119 = vunpack.c.l.b16 %v62
    %v120 = vunpack.c.l.b16 %v63
    %v121 = vunpack.c.l.b16 %v64
    %v122 = vunpack.c.l.b16 %v65
    %v123 = vunpack.c.l.b16 %v66
    %v124 = vunpack.c.l.b16 %v67
    %v125 = vunpack.c.l.b16 %v68
    %v126 = vunpack.c.l.b16 %v69
    %v127 = vunpack.c.l.b16 %v70
    %v128 = vpack.c.b16 %v105, %v104
    %v129 = vpack.c.b16 %v107, %v106
    %v130 = vpack.c.b16 %v109, %v108
    %v131 = vpack.c.b16 %v111, %v110
    %v132 = vpack.c.b16 %v113, %v112
    %v133 = vpack.c.b16 %v115, %v114
    %v134 = vpack.c.b16 %v117, %v116
    %v135 = vpack.c.b16 %v119, %v118
    %v136 = vpack.c.b16 %v121, %v120
    %v137 = vpack.c.b16 %v123, %v122
    %v138 = vpack.c.b16 %v125, %v124
    %v139 = vpack.c.b16 %v127, %v126
    %vm152 = vcmask 523264
    %v154 = vsel %vm152, %v78, 0
    %156 = vmatprep.subr.bf16.mxu0 0
    %157 = vmatpush1.bf16.msra.mxu0 %v128
    %158 = vmatprep.subr.bf16.mxu0 0
    %159 = vmatpush1.bf16.msra.mxu0 %v129
    %160 = vmatprep.subr.bf16.mxu0 0
    %161 = vmatpush1.bf16.msra.mxu0 %v130
    %162 = vmatprep.subr.bf16.mxu0 0
    %163 = vmatpush1.bf16.msra.mxu0 %v131
    %164 = vmatprep.subr.bf16.mxu0 0
    %165 = vmatpush1.bf16.msra.mxu0 %v132
    %166 = vmatprep.subr.bf16.mxu0 0
    %167 = vmatpush1.bf16.msra.mxu0 %v133
    %168 = vmatprep.subr.bf16.mxu0 0
    %169 = vmatpush1.bf16.msra.mxu0 %v134
    %170 = vmatprep.subr.bf16.mxu0 0
    %171 = vmatpush1.bf16.msra.mxu0 %v135
    %172 = vmatprep.subr.bf16.mxu0 0
    %173 = vmatpush1.bf16.msra.mxu0 %v136
    %174 = vmatprep.subr.bf16.mxu0 0
    %175 = vmatpush1.bf16.msra.mxu0 %v137
    %176 = vmatprep.subr.bf16.mxu0 0
    %177 = vmatpush1.bf16.msra.mxu0 %v138
    %178 = vmatprep.subr.bf16.mxu0 0
    %179 = vmatpush1.bf16.msra.mxu0 %v139
    %180 = vmatprep.subr.bf16.mxu0 0
    %181 = vmatpush1.bf16.msra.mxu0 0
    %182 = vmatprep.subr.bf16.mxu0 0
    %183 = vmatpush1.bf16.msra.mxu0 0
    %184 = vmatprep.subr.bf16.mxu0 0
    %185 = vmatpush1.bf16.msra.mxu0 0
    %186 = vmatprep.subr.bf16.mxu0 0
    %187 = vmatpush1.bf16.msra.mxu0 0
    %188 = vmatprep.mubr.bf16.mxu0 %v154
    %189 = vmatmul.mubr.bf16.gmra.mrb[0].mxu0 %v77
    %v190 = vpop.f32.mrb[0].mxu0
    %v191 = vadd.f32 0.0, %v190
    %v192 = vpop.f32.mrb[0].mxu0
    %v193 = vpop.f32.mrb[0].mxu0
    %v194 = vadd.f32 0.0, %v193
    %v195 = vpop.f32.mrb[0].mxu0
    %196 = vdwg.mxu0
    %v197 = vadd.f32 %v43, %v191
    %v198 = vadd.f32 %v44, %v194
    %v199 = vlaneseq
    %v200 = vand.u32 %v199, 127
    %vm201 = vcmp.lt.s32.totalorder %v200, 16
    %v202 = vlaneseq
    %v203 = vshrl.u32 %v202, 7
    %v204 = vadd.s32 %v203, 8
    %vm205 = vcmp.lt.s32.totalorder %v200, 0
    %v206 = vsub.s32 0, %v200
    %v207 = vsel %vm205, %v206, %v200
    %v208 = vshrl.u32 %v207, 4
    %v209 = vand.u32 %v207, 15
    %v210 = vsub.s32 0, %v209
    %v211 = vsel %vm205, %v210, %v209
    %vm212 = vcmp.ne.s32.totalorder %v211, 0
    %vm213 = vcmp.lt.s32.totalorder %v211, 0
    %vm214 = vmand %vm213, %vm212
    %v215 = vadd.s32 %v211, 16
    %v216 = vsel %vm214, %v215, %v211
    %vm217 = vcmp.le.s32.totalorder %v216, %v203
    %vm218 = vcmp.le.s32.totalorder %v216, %v204
    %v219 = vld [vmem:[%s4] sm:$0x1]
    %v220 = vmul.f32 %v197, %v197
    %v221 = vmul.f32 %v198, %v198
    %vm222 = vcmask 261120
    %v223 = vsel %vm222, %v220, 0.0
    %224 = vadd.xlane.f32.xlu0 %v223
    %v225 = vpop.xlane.xlu0 %224
    %v226 = vsel %vm222, %v221, 0.0
    %227 = vadd.xlane.f32.xlu0 %v226
    %v228 = vpop.xlane.xlu0 %227
    %v229 = vrcp.pop 32.0
    %v230 = vmul.f32 %v225, %v229
    %v231 = vmul.f32 %v228, %v229
    %v232 = vadd.f32 %v230, 1e-06
    %v233 = vadd.f32 %v231, 1e-06
    %v234 = vrsqrt.pop %v232
    %v235 = vrsqrt.pop %v233
    %v236 = vmul.f32 %v197, %v234
    %v237 = vmul.f32 %v198, %v235
    %v239 = vlaneseq
    %v240 = vshrl.u32 %v239, 7
    %v241 = vsub.s32 0, %v240
    %v242 = vrot.slane %v219, %v241
    %v244 = vmul.f32 %v236, %v242
    %v245 = vmul.f32 %v237, %v242
    %v246 = vpack.c.bf16 %v245, %v244
    %v247 = vld [vmem:[%s5] sm:$0xf]
    %v248 = vld [vmem:[%s5 + $0x4] sm:$0xf]
    %v249 = vld [vmem:[%s5 + $0x8] sm:$0xf]
    %v250 = vld [vmem:[%s5 + $0xc] sm:$0xf]
    %v255 = vunpack.c.l.b16 %v247
    %v256 = vunpack.c.l.b16 %v248
    %v257 = vunpack.c.l.b16 %v249
    %v258 = vunpack.c.l.b16 %v250
    %v259 = vpack.c.b16 %v256, %v255
    %v260 = vpack.c.b16 %v258, %v257
    %v264 = vsel %vm222, %v246, 0
    %266 = vmatprep.subr.bf16.mxu0 0
    %267 = vmatpush1.bf16.msra.mxu0 %v259
    %268 = vmatprep.subr.bf16.mxu0 0
    %269 = vmatpush1.bf16.msra.mxu0 %v260
    %270 = vmatprep.subr.bf16.mxu0 0
    %271 = vmatpush1.bf16.msra.mxu0 0
    %272 = vmatprep.subr.bf16.mxu0 0
    %273 = vmatpush1.bf16.msra.mxu0 0
    %274 = vmatprep.subr.bf16.mxu0 0
    %275 = vmatpush1.bf16.msra.mxu0 0
    %276 = vmatprep.subr.bf16.mxu0 0
    %277 = vmatpush1.bf16.msra.mxu0 0
    %278 = vmatprep.subr.bf16.mxu0 0
    %279 = vmatpush1.bf16.msra.mxu0 0
    %280 = vmatprep.subr.bf16.mxu0 0
    %281 = vmatpush1.bf16.msra.mxu0 0
    %282 = vmatprep.subr.bf16.mxu0 0
    %283 = vmatpush1.bf16.msra.mxu0 0
    %284 = vmatprep.subr.bf16.mxu0 0
    %285 = vmatpush1.bf16.msra.mxu0 0
    %286 = vmatprep.subr.bf16.mxu0 0
    %287 = vmatpush1.bf16.msra.mxu0 0
    %288 = vmatprep.subr.bf16.mxu0 0
    %289 = vmatpush1.bf16.msra.mxu0 0
    %290 = vmatprep.subr.bf16.mxu0 0
    %291 = vmatpush1.bf16.msra.mxu0 0
    %292 = vmatprep.subr.bf16.mxu0 0
    %293 = vmatpush1.bf16.msra.mxu0 0
    %294 = vmatprep.subr.bf16.mxu0 0
    %295 = vmatpush1.bf16.msra.mxu0 0
    %296 = vmatprep.subr.bf16.mxu0 0
    %297 = vmatpush1.bf16.msra.mxu0 0
    %298 = vmatprep.mubr.bf16.mxu0 0
    %299 = vmatmul.mubr.bf16.gmra.mrb[0].mxu0 %v264
    %v300 = vpop.f32.mrb[0].mxu0
    %v301 = vadd.f32 0.0, %v300
    %v302 = vpop.f32.mrb[0].mxu0
    %v303 = vpop.f32.mrb[0].mxu0
    %v304 = vadd.f32 0.0, %v303
    %v305 = vpop.f32.mrb[0].mxu0
    %306 = vdwg.mxu0
    %309 = vrot.lane.b32.xlu0 %v301, 96
    %v310 = vpop.permute.xlu0 %309
    %311 = vrot.lane.b32.xlu0 %v304, 96
    %v312 = vpop.permute.xlu0 %311
    %v315 = vsel %vm201, %v310, 0.0
    %v316 = vsel %vm201, %v312, 0.0
    %v317 = vsel %vm201, 0.0, %v310
    %v318 = vsel %vm201, 0.0, %v312
    %v319 = vpack.c.bf16 %v316, %v315
    %v320 = vpack.c.bf16 %v318, %v317
    %321 = vrot.lane.b32.xlu0 %v301, 64
    %v322 = vpop.permute.xlu0 %321
    %323 = vrot.lane.b32.xlu0 %v304, 64
    %v324 = vpop.permute.xlu0 %323
    %v327 = vsel %vm201, %v322, 0.0
    %v328 = vsel %vm201, %v324, 0.0
    %v329 = vsel %vm201, 0.0, %v322
    %v330 = vsel %vm201, 0.0, %v324
    %v331 = vpack.c.bf16 %v328, %v327
    %v332 = vpack.c.bf16 %v330, %v329
    %v333 = vpack.c.bf16 %v304, %v301
    %v335 = vsel %vm222, %v333, 0
    %v338 = vsel %vm222, %v319, 0
    %v341 = vsel %vm222, %v320, 0
    %343 = vmatprep.subr.bf16.mxu0 0
    %344 = vmatpush1.bf16.xpose.msra.mxu0 %v338
    %345 = vmatprep.subr.bf16.mxu0 0
    %346 = vmatpush1.bf16.xpose.msra.mxu0 %v341
    %347 = vmatprep.subr.bf16.mxu0 0
    %348 = vmatpush1.bf16.xpose.msra.mxu0 0
    %349 = vmatprep.subr.bf16.mxu0 0
    %350 = vmatpush1.bf16.xpose.msra.mxu0 0
    %351 = vmatprep.subr.bf16.mxu0 0
    %352 = vmatpush1.bf16.xpose.msra.mxu0 0
    %353 = vmatprep.subr.bf16.mxu0 0
    %354 = vmatpush1.bf16.xpose.msra.mxu0 0
    %355 = vmatprep.subr.bf16.mxu0 0
    %356 = vmatpush1.bf16.xpose.msra.mxu0 0
    %357 = vmatprep.subr.bf16.mxu0 0
    %358 = vmatpush1.bf16.xpose.msra.mxu0 0
    %359 = vmatprep.subr.bf16.mxu0 0
    %360 = vmatpush1.bf16.xpose.msra.mxu0 0
    %361 = vmatprep.subr.bf16.mxu0 0
    %362 = vmatpush1.bf16.xpose.msra.mxu0 0
    %363 = vmatprep.subr.bf16.mxu0 0
    %364 = vmatpush1.bf16.xpose.msra.mxu0 0
    %365 = vmatprep.subr.bf16.mxu0 0
    %366 = vmatpush1.bf16.xpose.msra.mxu0 0
    %367 = vmatprep.subr.bf16.mxu0 0
    %368 = vmatpush1.bf16.xpose.msra.mxu0 0
    %369 = vmatprep.subr.bf16.mxu0 0
    %370 = vmatpush1.bf16.xpose.msra.mxu0 0
    %371 = vmatprep.subr.bf16.mxu0 0
    %372 = vmatpush1.bf16.xpose.msra.mxu0 0
    %373 = vmatprep.subr.bf16.mxu0 0
    %374 = vmatpush1.bf16.xpose.msra.mxu0 0
    %375 = vmatprep.mubr.bf16.mxu0 0
    %376 = vmatmul.mubr.bf16.gmra.mrb[0].mxu0 %v335
    %v377 = vpop.f32.mrb[0].mxu0
    %v378 = vadd.f32 0.0, %v377
    %v379 = vpop.f32.mrb[0].mxu0
    %v380 = vpop.f32.mrb[0].mxu0
    %v381 = vadd.f32 0.0, %v380
    %v382 = vpop.f32.mrb[0].mxu0
    %383 = vdwg.mxu0
    %v384 = vmul.f32 %v378, 0.25
    %v385 = vmul.f32 %v381, 0.25
    %v386 = vsel %vm217, %v384, -1e+30
    %v387 = vsel %vm218, %v385, -1e+30
    %v388 = vsel %vm201, %v386, -1e+30
    %v389 = vsel %vm201, %v387, -1e+30
    %v390 = vsel %vm222, %v388, -inf
    %391 = vmax.xlane.f32.xlu0 %v390
    %v392 = vpop.xlane.xlu0 %391
    %v393 = vsel %vm222, %v389, -inf
    %394 = vmax.xlane.f32.xlu0 %v393
    %v395 = vpop.xlane.xlu0 %394
    %v396 = vsel %vm201, -1e+30, %v386
    %v397 = vsel %vm201, -1e+30, %v387
    %v398 = vsel %vm222, %v396, -inf
    %399 = vmax.xlane.f32.xlu0 %v398
    %v400 = vpop.xlane.xlu0 %399
    %v401 = vsel %vm222, %v397, -inf
    %402 = vmax.xlane.f32.xlu0 %v401
    %v403 = vpop.xlane.xlu0 %402
    %v404 = vsel %vm201, %v392, %v400
    %v405 = vsel %vm201, %v395, %v403
    %v406 = vsub.f32 %v386, %v404
    %v407 = vsub.f32 %v387, %v405
    %v408 = vmul.f32 %v406, 1.442695
    %v409 = vpow.pop %v408
    %v410 = vmul.f32 %v407, 1.442695
    %v411 = vpow.pop %v410
    %v412 = vsel %vm201, %v409, 0.0
    %v413 = vsel %vm201, %v411, 0.0
    %v414 = vsel %vm222, %v412, 0.0
    %415 = vadd.xlane.f32.xlu0 %v414
    %v416 = vpop.xlane.xlu0 %415
    %v417 = vsel %vm222, %v413, 0.0
    %418 = vadd.xlane.f32.xlu0 %v417
    %v419 = vpop.xlane.xlu0 %418
    %v420 = vsel %vm201, 0.0, %v409
    %v421 = vsel %vm201, 0.0, %v411
    %v422 = vsel %vm222, %v420, 0.0
    %423 = vadd.xlane.f32.xlu0 %v422
    %v424 = vpop.xlane.xlu0 %423
    %v425 = vsel %vm222, %v421, 0.0
    %426 = vadd.xlane.f32.xlu0 %v425
    %v427 = vpop.xlane.xlu0 %426
    %v428 = vsel %vm201, %v416, %v424
    %v429 = vsel %vm201, %v419, %v427
    %v430 = vrcp.pop %v428
    %v431 = vrcp.pop %v429
    %v432 = vmul.f32 %v409, %v430
    %v433 = vmul.f32 %v411, %v431
    %v434 = vpack.c.bf16 %v433, %v432
    %v436 = vsel %vm222, %v434, 0
    %438 = vmatprep.subr.bf16.mxu0 0
    %439 = vmatpush1.bf16.msra.mxu0 %v331
    %440 = vmatprep.subr.bf16.mxu0 0
    %441 = vmatpush1.bf16.msra.mxu0 %v332
    %442 = vmatprep.subr.bf16.mxu0 0
    %443 = vmatpush1.bf16.msra.mxu0 0
    %444 = vmatprep.subr.bf16.mxu0 0
    %445 = vmatpush1.bf16.msra.mxu0 0
    %446 = vmatprep.subr.bf16.mxu0 0
    %447 = vmatpush1.bf16.msra.mxu0 0
    %448 = vmatprep.subr.bf16.mxu0 0
    %449 = vmatpush1.bf16.msra.mxu0 0
    %450 = vmatprep.subr.bf16.mxu0 0
    %451 = vmatpush1.bf16.msra.mxu0 0
    %452 = vmatprep.subr.bf16.mxu0 0
    %453 = vmatpush1.bf16.msra.mxu0 0
    %454 = vmatprep.subr.bf16.mxu0 0
    %455 = vmatpush1.bf16.msra.mxu0 0
    %456 = vmatprep.subr.bf16.mxu0 0
    %457 = vmatpush1.bf16.msra.mxu0 0
    %458 = vmatprep.subr.bf16.mxu0 0
    %459 = vmatpush1.bf16.msra.mxu0 0
    %460 = vmatprep.subr.bf16.mxu0 0
    %461 = vmatpush1.bf16.msra.mxu0 0
    %462 = vmatprep.subr.bf16.mxu0 0
    %463 = vmatpush1.bf16.msra.mxu0 0
    %464 = vmatprep.subr.bf16.mxu0 0
    %465 = vmatpush1.bf16.msra.mxu0 0
    %466 = vmatprep.subr.bf16.mxu0 0
    %467 = vmatpush1.bf16.msra.mxu0 0
    %468 = vmatprep.subr.bf16.mxu0 0
    %469 = vmatpush1.bf16.msra.mxu0 0
    %470 = vmatprep.mubr.bf16.mxu0 0
    %471 = vmatmul.mubr.bf16.gmra.mrb[0].mxu0 %v436
    %v472 = vpop.f32.mrb[0].mxu0
    %v473 = vadd.f32 0.0, %v472
    %v474 = vpop.f32.mrb[0].mxu0
    %v475 = vpop.f32.mrb[0].mxu0
    %v476 = vadd.f32 0.0, %v475
    %v477 = vpop.f32.mrb[0].mxu0
    %478 = vdwg.mxu0
    %v479 = vpack.c.bf16 %v476, %v473
    %v480 = vld [vmem:[%s6] sm:$0xf]
    %v481 = vld [vmem:[%s6 + $0x4] sm:$0xf]
    %v482 = vld [vmem:[%s6 + $0x8] sm:$0xf]
    %v483 = vld [vmem:[%s6 + $0xc] sm:$0xf]
    %v488 = vunpack.c.l.b16 %v480
    %v489 = vunpack.c.l.b16 %v481
    %v490 = vunpack.c.l.b16 %v482
    %v491 = vunpack.c.l.b16 %v483
    %v492 = vpack.c.b16 %v489, %v488
    %v493 = vpack.c.b16 %v491, %v490
    %v497 = vsel %vm222, %v479, 0
    %499 = vmatprep.subr.bf16.mxu0 0
    %500 = vmatpush1.bf16.msra.mxu0 %v492
    %501 = vmatprep.subr.bf16.mxu0 0
    %502 = vmatpush1.bf16.msra.mxu0 %v493
    %503 = vmatprep.subr.bf16.mxu0 0
    %504 = vmatpush1.bf16.msra.mxu0 0
    %505 = vmatprep.subr.bf16.mxu0 0
    %506 = vmatpush1.bf16.msra.mxu0 0
    %507 = vmatprep.subr.bf16.mxu0 0
    %508 = vmatpush1.bf16.msra.mxu0 0
    %509 = vmatprep.subr.bf16.mxu0 0
    %510 = vmatpush1.bf16.msra.mxu0 0
    %511 = vmatprep.subr.bf16.mxu0 0
    %512 = vmatpush1.bf16.msra.mxu0 0
    %513 = vmatprep.subr.bf16.mxu0 0
    %514 = vmatpush1.bf16.msra.mxu0 0
    %515 = vmatprep.subr.bf16.mxu0 0
    %516 = vmatpush1.bf16.msra.mxu0 0
    %517 = vmatprep.subr.bf16.mxu0 0
    %518 = vmatpush1.bf16.msra.mxu0 0
    %519 = vmatprep.subr.bf16.mxu0 0
    %520 = vmatpush1.bf16.msra.mxu0 0
    %521 = vmatprep.subr.bf16.mxu0 0
    %522 = vmatpush1.bf16.msra.mxu0 0
    %523 = vmatprep.subr.bf16.mxu0 0
    %524 = vmatpush1.bf16.msra.mxu0 0
    %525 = vmatprep.subr.bf16.mxu0 0
    %526 = vmatpush1.bf16.msra.mxu0 0
    %527 = vmatprep.subr.bf16.mxu0 0
    %528 = vmatpush1.bf16.msra.mxu0 0
    %529 = vmatprep.subr.bf16.mxu0 0
    %530 = vmatpush1.bf16.msra.mxu0 0
    %531 = vmatprep.mubr.bf16.mxu0 0
    %532 = vmatmul.mubr.bf16.gmra.mrb[0].mxu0 %v497
    %v533 = vpop.f32.mrb[0].mxu0
    %v534 = vadd.f32 0.0, %v533
    %v535 = vpop.f32.mrb[0].mxu0
    %v536 = vpop.f32.mrb[0].mxu0
    %v537 = vadd.f32 0.0, %v536
    %v538 = vpop.f32.mrb[0].mxu0
    %539 = vdwg.mxu0
    %v540 = vadd.f32 %v197, %v534
    %v541 = vadd.f32 %v198, %v537
    %v542 = vld [vmem:[%s7] sm:$0x1]
    %v543 = vmul.f32 %v540, %v540
    %v544 = vmul.f32 %v541, %v541
    %v545 = vsel %vm222, %v543, 0.0
    %546 = vadd.xlane.f32.xlu0 %v545
    %v547 = vpop.xlane.xlu0 %546
    %v548 = vsel %vm222, %v544, 0.0
    %549 = vadd.xlane.f32.xlu0 %v548
    %v550 = vpop.xlane.xlu0 %549
    %v551 = vmul.f32 %v547, %v229
    %v552 = vmul.f32 %v550, %v229
    %v553 = vadd.f32 %v551, 1e-06
    %v554 = vadd.f32 %v552, 1e-06
    %v555 = vrsqrt.pop %v553
    %v556 = vrsqrt.pop %v554
    %v557 = vmul.f32 %v540, %v555
    %v558 = vmul.f32 %v541, %v556
    %v560 = vlaneseq
    %v561 = vshrl.u32 %v560, 7
    %v562 = vsub.s32 0, %v561
    %v563 = vrot.slane %v542, %v562
    %v565 = vmul.f32 %v557, %v563
    %v566 = vmul.f32 %v558, %v563
    %v567 = vpack.c.bf16 %v566, %v565
    %v568 = vld [vmem:[%s8] sm:$0xf]
    %v569 = vld [vmem:[%s8 + $0x4] sm:$0xf]
    %v570 = vld [vmem:[%s8 + $0x8] sm:$0xf]
    %v571 = vld [vmem:[%s8 + $0xc] sm:$0xf]
    %v576 = vunpack.c.l.b16 %v568
    %v577 = vunpack.c.l.b16 %v569
    %v578 = vunpack.c.l.b16 %v570
    %v579 = vunpack.c.l.b16 %v571
    %v580 = vpack.c.b16 %v577, %v576
    %v581 = vpack.c.b16 %v579, %v578
    %v585 = vsel %vm222, %v567, 0
    %587 = vmatprep.subr.bf16.mxu0 0
    %588 = vmatpush1.bf16.msra.mxu0 %v580
    %589 = vmatprep.subr.bf16.mxu0 0
    %590 = vmatpush1.bf16.msra.mxu0 %v581
    %591 = vmatprep.subr.bf16.mxu0 0
    %592 = vmatpush1.bf16.msra.mxu0 0
    %593 = vmatprep.subr.bf16.mxu0 0
    %594 = vmatpush1.bf16.msra.mxu0 0
    %595 = vmatprep.subr.bf16.mxu0 0
    %596 = vmatpush1.bf16.msra.mxu0 0
    %597 = vmatprep.subr.bf16.mxu0 0
    %598 = vmatpush1.bf16.msra.mxu0 0
    %599 = vmatprep.subr.bf16.mxu0 0
    %600 = vmatpush1.bf16.msra.mxu0 0
    %601 = vmatprep.subr.bf16.mxu0 0
    %602 = vmatpush1.bf16.msra.mxu0 0
    %603 = vmatprep.subr.bf16.mxu0 0
    %604 = vmatpush1.bf16.msra.mxu0 0
    %605 = vmatprep.subr.bf16.mxu0 0
    %606 = vmatpush1.bf16.msra.mxu0 0
    %607 = vmatprep.subr.bf16.mxu0 0
    %608 = vmatpush1.bf16.msra.mxu0 0
    %609 = vmatprep.subr.bf16.mxu0 0
    %610 = vmatpush1.bf16.msra.mxu0 0
    %611 = vmatprep.subr.bf16.mxu0 0
    %612 = vmatpush1.bf16.msra.mxu0 0
    %613 = vmatprep.subr.bf16.mxu0 0
    %614 = vmatpush1.bf16.msra.mxu0 0
    %615 = vmatprep.subr.bf16.mxu0 0
    %616 = vmatpush1.bf16.msra.mxu0 0
    %617 = vmatprep.subr.bf16.mxu0 0
    %618 = vmatpush1.bf16.msra.mxu0 0
    %619 = vmatprep.mubr.bf16.mxu0 0
    %620 = vmatmul.mubr.bf16.gmra.mrb[0].mxu0 %v585
    %v621 = vpop.f32.mrb[0].mxu0
    %v622 = vadd.f32 0.0, %v621
    %v623 = vpop.f32.mrb[0].mxu0
    %v624 = vpop.f32.mrb[0].mxu0
    %v625 = vadd.f32 0.0, %v624
    %v626 = vpop.f32.mrb[0].mxu0
    %627 = vdwg.mxu0
    %v628 = vxor.u32 %v622, 2147483648
    %v629 = vxor.u32 %v625, 2147483648
    %v630 = vmul.f32 %v628, 1.442695
    %v631 = vpow.pop %v630
    %v632 = vmul.f32 %v629, 1.442695
    %v633 = vpow.pop %v632
    %v634 = vadd.f32 %v631, 1.0
    %v635 = vadd.f32 %v633, 1.0
    %v636 = vrcp.pop %v634
    %v637 = vmul.f32 1.0, %v636
    %v638 = vrcp.pop %v635
    %v639 = vmul.f32 1.0, %v638
    %v640 = vmul.f32 %v622, %v637
    %v641 = vmul.f32 %v625, %v639
    %644 = vrot.lane.b32.xlu0 %v622, 64
    %v645 = vpop.permute.xlu0 %644
    %646 = vrot.lane.b32.xlu0 %v625, 64
    %v647 = vpop.permute.xlu0 %646
    %v650 = vmul.f32 %v640, %v645
    %v651 = vmul.f32 %v641, %v647
    %v652 = vpack.c.bf16 %v651, %v650
    %v653 = vld [vmem:[%s9] sm:$0xf]
    %v654 = vld [vmem:[%s9 + $0x4] sm:$0xf]
    %v655 = vld [vmem:[%s9 + $0x8] sm:$0xf]
    %v656 = vld [vmem:[%s9 + $0xc] sm:$0xf]
    %v657 = vld [vmem:[%s9 + $0x10] sm:$0xf]
    %v658 = vld [vmem:[%s9 + $0x14] sm:$0xf]
    %v659 = vld [vmem:[%s9 + $0x18] sm:$0xf]
    %v660 = vld [vmem:[%s9 + $0x1c] sm:$0xf]
    %v669 = vunpack.c.l.b16 %v653
    %v670 = vunpack.c.l.b16 %v654
    %v671 = vunpack.c.l.b16 %v655
    %v672 = vunpack.c.l.b16 %v656
    %v673 = vunpack.c.l.b16 %v657
    %v674 = vunpack.c.l.b16 %v658
    %v675 = vunpack.c.l.b16 %v659
    %v676 = vunpack.c.l.b16 %v660
    %v677 = vpack.c.b16 %v670, %v669
    %v678 = vpack.c.b16 %v672, %v671
    %v679 = vpack.c.b16 %v674, %v673
    %v680 = vpack.c.b16 %v676, %v675
    %v686 = vsel %vm152, %v652, 0
    %688 = vmatprep.subr.bf16.mxu0 0
    %689 = vmatpush1.bf16.msra.mxu0 %v677
    %690 = vmatprep.subr.bf16.mxu0 0
    %691 = vmatpush1.bf16.msra.mxu0 %v678
    %692 = vmatprep.subr.bf16.mxu0 0
    %693 = vmatpush1.bf16.msra.mxu0 %v679
    %694 = vmatprep.subr.bf16.mxu0 0
    %695 = vmatpush1.bf16.msra.mxu0 %v680
    %696 = vmatprep.subr.bf16.mxu0 0
    %697 = vmatpush1.bf16.msra.mxu0 0
    %698 = vmatprep.subr.bf16.mxu0 0
    %699 = vmatpush1.bf16.msra.mxu0 0
    %700 = vmatprep.subr.bf16.mxu0 0
    %701 = vmatpush1.bf16.msra.mxu0 0
    %702 = vmatprep.subr.bf16.mxu0 0
    %703 = vmatpush1.bf16.msra.mxu0 0
    %704 = vmatprep.subr.bf16.mxu0 0
    %705 = vmatpush1.bf16.msra.mxu0 0
    %706 = vmatprep.subr.bf16.mxu0 0
    %707 = vmatpush1.bf16.msra.mxu0 0
    %708 = vmatprep.subr.bf16.mxu0 0
    %709 = vmatpush1.bf16.msra.mxu0 0
    %710 = vmatprep.subr.bf16.mxu0 0
    %711 = vmatpush1.bf16.msra.mxu0 0
    %712 = vmatprep.subr.bf16.mxu0 0
    %713 = vmatpush1.bf16.msra.mxu0 0
    %714 = vmatprep.subr.bf16.mxu0 0
    %715 = vmatpush1.bf16.msra.mxu0 0
    %716 = vmatprep.subr.bf16.mxu0 0
    %717 = vmatpush1.bf16.msra.mxu0 0
    %718 = vmatprep.subr.bf16.mxu0 0
    %719 = vmatpush1.bf16.msra.mxu0 0
    %720 = vmatprep.mubr.bf16.mxu0 0
    %721 = vmatmul.mubr.bf16.gmra.mrb[0].mxu0 %v686
    %v722 = vpop.f32.mrb[0].mxu0
    %v723 = vadd.f32 0.0, %v722
    %v724 = vpop.f32.mrb[0].mxu0
    %v725 = vpop.f32.mrb[0].mxu0
    %v726 = vadd.f32 0.0, %v725
    %v727 = vpop.f32.mrb[0].mxu0
    %728 = vdwg.mxu0
    %v729 = vadd.f32 %v540, %v723
    %v730 = vadd.f32 %v541, %v726
    %s731 = scalar_lea.vmem %s4, 1
    %v732 = vld [vmem:[%s731] sm:$0x1]
    %v733 = vmul.f32 %v729, %v729
    %v734 = vmul.f32 %v730, %v730
    %v735 = vsel %vm222, %v733, 0.0
    %736 = vadd.xlane.f32.xlu0 %v735
    %v737 = vpop.xlane.xlu0 %736
    %v738 = vsel %vm222, %v734, 0.0
    %739 = vadd.xlane.f32.xlu0 %v738
    %v740 = vpop.xlane.xlu0 %739
    %v741 = vmul.f32 %v737, %v229
    %v742 = vmul.f32 %v740, %v229
    %v743 = vadd.f32 %v741, 1e-06
    %v744 = vadd.f32 %v742, 1e-06
    %v745 = vrsqrt.pop %v743
    %v746 = vrsqrt.pop %v744
    %v747 = vmul.f32 %v729, %v745
    %v748 = vmul.f32 %v730, %v746
    %v750 = vlaneseq
    %v751 = vshrl.u32 %v750, 7
    %v752 = vsub.s32 0, %v751
    %v753 = vrot.slane %v732, %v752
    %v755 = vmul.f32 %v747, %v753
    %v756 = vmul.f32 %v748, %v753
    %v757 = vpack.c.bf16 %v756, %v755
    %s758 = scalar_lea.vmem %s5, 16
    %v759 = vld [vmem:[%s758] sm:$0xf]
    %v760 = vld [vmem:[%s758 + $0x4] sm:$0xf]
    %v761 = vld [vmem:[%s758 + $0x8] sm:$0xf]
    %v762 = vld [vmem:[%s758 + $0xc] sm:$0xf]
    %v767 = vunpack.c.l.b16 %v759
    %v768 = vunpack.c.l.b16 %v760
    %v769 = vunpack.c.l.b16 %v761
    %v770 = vunpack.c.l.b16 %v762
    %v771 = vpack.c.b16 %v768, %v767
    %v772 = vpack.c.b16 %v770, %v769
    %v776 = vsel %vm222, %v757, 0
    %778 = vmatprep.subr.bf16.mxu0 0
    %779 = vmatpush1.bf16.msra.mxu0 %v771
    %780 = vmatprep.subr.bf16.mxu0 0
    %781 = vmatpush1.bf16.msra.mxu0 %v772
    %782 = vmatprep.subr.bf16.mxu0 0
    %783 = vmatpush1.bf16.msra.mxu0 0
    %784 = vmatprep.subr.bf16.mxu0 0
    %785 = vmatpush1.bf16.msra.mxu0 0
    %786 = vmatprep.subr.bf16.mxu0 0
    %787 = vmatpush1.bf16.msra.mxu0 0
    %788 = vmatprep.subr.bf16.mxu0 0
    %789 = vmatpush1.bf16.msra.mxu0 0
    %790 = vmatprep.subr.bf16.mxu0 0
    %791 = vmatpush1.bf16.msra.mxu0 0
    %792 = vmatprep.subr.bf16.mxu0 0
    %793 = vmatpush1.bf16.msra.mxu0 0
    %794 = vmatprep.subr.bf16.mxu0 0
    %795 = vmatpush1.bf16.msra.mxu0 0
    %796 = vmatprep.subr.bf16.mxu0 0
    %797 = vmatpush1.bf16.msra.mxu0 0
    %798 = vmatprep.subr.bf16.mxu0 0
    %799 = vmatpush1.bf16.msra.mxu0 0
    %800 = vmatprep.subr.bf16.mxu0 0
    %801 = vmatpush1.bf16.msra.mxu0 0
    %802 = vmatprep.subr.bf16.mxu0 0
    %803 = vmatpush1.bf16.msra.mxu0 0
    %804 = vmatprep.subr.bf16.mxu0 0
    %805 = vmatpush1.bf16.msra.mxu0 0
    %806 = vmatprep.subr.bf16.mxu0 0
    %807 = vmatpush1.bf16.msra.mxu0 0
    %808 = vmatprep.subr.bf16.mxu0 0
    %809 = vmatpush1.bf16.msra.mxu0 0
    %810 = vmatprep.mubr.bf16.mxu0 0
    %811 = vmatmul.mubr.bf16.gmra.mrb[0].mxu0 %v776
    %v812 = vpop.f32.mrb[0].mxu0
    %v813 = vadd.f32 0.0, %v812
    %v814 = vpop.f32.mrb[0].mxu0
    %v815 = vpop.f32.mrb[0].mxu0
    %v816 = vadd.f32 0.0, %v815
    %v817 = vpop.f32.mrb[0].mxu0
    %818 = vdwg.mxu0
    %821 = vrot.lane.b32.xlu0 %v813, 96
    %v822 = vpop.permute.xlu0 %821
    %823 = vrot.lane.b32.xlu0 %v816, 96
    %v824 = vpop.permute.xlu0 %823
    %v827 = vsel %vm201, %v822, 0.0
    %v828 = vsel %vm201, %v824, 0.0
    %v829 = vsel %vm201, 0.0, %v822
    %v830 = vsel %vm201, 0.0, %v824
    %v831 = vpack.c.bf16 %v828, %v827
    %v832 = vpack.c.bf16 %v830, %v829
    %833 = vrot.lane.b32.xlu0 %v813, 64
    %v834 = vpop.permute.xlu0 %833
    %835 = vrot.lane.b32.xlu0 %v816, 64
    %v836 = vpop.permute.xlu0 %835
    %v839 = vsel %vm201, %v834, 0.0
    %v840 = vsel %vm201, %v836, 0.0
    %v841 = vsel %vm201, 0.0, %v834
    %v842 = vsel %vm201, 0.0, %v836
    %v843 = vpack.c.bf16 %v840, %v839
    %v844 = vpack.c.bf16 %v842, %v841
    %v845 = vpack.c.bf16 %v816, %v813
    %v847 = vsel %vm222, %v845, 0
    %v850 = vsel %vm222, %v831, 0
    %v853 = vsel %vm222, %v832, 0
    %855 = vmatprep.subr.bf16.mxu0 0
    %856 = vmatpush1.bf16.xpose.msra.mxu0 %v850
    %857 = vmatprep.subr.bf16.mxu0 0
    %858 = vmatpush1.bf16.xpose.msra.mxu0 %v853
    %859 = vmatprep.subr.bf16.mxu0 0
    %860 = vmatpush1.bf16.xpose.msra.mxu0 0
    %861 = vmatprep.subr.bf16.mxu0 0
    %862 = vmatpush1.bf16.xpose.msra.mxu0 0
    %863 = vmatprep.subr.bf16.mxu0 0
    %864 = vmatpush1.bf16.xpose.msra.mxu0 0
    %865 = vmatprep.subr.bf16.mxu0 0
    %866 = vmatpush1.bf16.xpose.msra.mxu0 0
    %867 = vmatprep.subr.bf16.mxu0 0
    %868 = vmatpush1.bf16.xpose.msra.mxu0 0
    %869 = vmatprep.subr.bf16.mxu0 0
    %870 = vmatpush1.bf16.xpose.msra.mxu0 0
    %871 = vmatprep.subr.bf16.mxu0 0
    %872 = vmatpush1.bf16.xpose.msra.mxu0 0
    %873 = vmatprep.subr.bf16.mxu0 0
    %874 = vmatpush1.bf16.xpose.msra.mxu0 0
    %875 = vmatprep.subr.bf16.mxu0 0
    %876 = vmatpush1.bf16.xpose.msra.mxu0 0
    %877 = vmatprep.subr.bf16.mxu0 0
    %878 = vmatpush1.bf16.xpose.msra.mxu0 0
    %879 = vmatprep.subr.bf16.mxu0 0
    %880 = vmatpush1.bf16.xpose.msra.mxu0 0
    %881 = vmatprep.subr.bf16.mxu0 0
    %882 = vmatpush1.bf16.xpose.msra.mxu0 0
    %883 = vmatprep.subr.bf16.mxu0 0
    %884 = vmatpush1.bf16.xpose.msra.mxu0 0
    %885 = vmatprep.subr.bf16.mxu0 0
    %886 = vmatpush1.bf16.xpose.msra.mxu0 0
    %887 = vmatprep.mubr.bf16.mxu0 0
    %888 = vmatmul.mubr.bf16.gmra.mrb[0].mxu0 %v847
    %v889 = vpop.f32.mrb[0].mxu0
    %v890 = vadd.f32 0.0, %v889
    %v891 = vpop.f32.mrb[0].mxu0
    %v892 = vpop.f32.mrb[0].mxu0
    %v893 = vadd.f32 0.0, %v892
    %v894 = vpop.f32.mrb[0].mxu0
    %895 = vdwg.mxu0
    %v896 = vmul.f32 %v890, 0.25
    %v897 = vmul.f32 %v893, 0.25
    %v898 = vsel %vm217, %v896, -1e+30
    %v899 = vsel %vm218, %v897, -1e+30
    %v900 = vsel %vm201, %v898, -1e+30
    %v901 = vsel %vm201, %v899, -1e+30
    %v902 = vsel %vm222, %v900, -inf
    %903 = vmax.xlane.f32.xlu0 %v902
    %v904 = vpop.xlane.xlu0 %903
    %v905 = vsel %vm222, %v901, -inf
    %906 = vmax.xlane.f32.xlu0 %v905
    %v907 = vpop.xlane.xlu0 %906
    %v908 = vsel %vm201, -1e+30, %v898
    %v909 = vsel %vm201, -1e+30, %v899
    %v910 = vsel %vm222, %v908, -inf
    %911 = vmax.xlane.f32.xlu0 %v910
    %v912 = vpop.xlane.xlu0 %911
    %v913 = vsel %vm222, %v909, -inf
    %914 = vmax.xlane.f32.xlu0 %v913
    %v915 = vpop.xlane.xlu0 %914
    %v916 = vsel %vm201, %v904, %v912
    %v917 = vsel %vm201, %v907, %v915
    %v918 = vsub.f32 %v898, %v916
    %v919 = vsub.f32 %v899, %v917
    %v920 = vmul.f32 %v918, 1.442695
    %v921 = vpow.pop %v920
    %v922 = vmul.f32 %v919, 1.442695
    %v923 = vpow.pop %v922
    %v924 = vsel %vm201, %v921, 0.0
    %v925 = vsel %vm201, %v923, 0.0
    %v926 = vsel %vm222, %v924, 0.0
    %927 = vadd.xlane.f32.xlu0 %v926
    %v928 = vpop.xlane.xlu0 %927
    %v929 = vsel %vm222, %v925, 0.0
    %930 = vadd.xlane.f32.xlu0 %v929
    %v931 = vpop.xlane.xlu0 %930
    %v932 = vsel %vm201, 0.0, %v921
    %v933 = vsel %vm201, 0.0, %v923
    %v934 = vsel %vm222, %v932, 0.0
    %935 = vadd.xlane.f32.xlu0 %v934
    %v936 = vpop.xlane.xlu0 %935
    %v937 = vsel %vm222, %v933, 0.0
    %938 = vadd.xlane.f32.xlu0 %v937
    %v939 = vpop.xlane.xlu0 %938
    %v940 = vsel %vm201, %v928, %v936
    %v941 = vsel %vm201, %v931, %v939
    %v942 = vrcp.pop %v940
    %v943 = vrcp.pop %v941
    %v944 = vmul.f32 %v921, %v942
    %v945 = vmul.f32 %v923, %v943
    %v946 = vpack.c.bf16 %v945, %v944
    %v948 = vsel %vm222, %v946, 0
    %950 = vmatprep.subr.bf16.mxu0 0
    %951 = vmatpush1.bf16.msra.mxu0 %v843
    %952 = vmatprep.subr.bf16.mxu0 0
    %953 = vmatpush1.bf16.msra.mxu0 %v844
    %954 = vmatprep.subr.bf16.mxu0 0
    %955 = vmatpush1.bf16.msra.mxu0 0
    %956 = vmatprep.subr.bf16.mxu0 0
    %957 = vmatpush1.bf16.msra.mxu0 0
    %958 = vmatprep.subr.bf16.mxu0 0
    %959 = vmatpush1.bf16.msra.mxu0 0
    %960 = vmatprep.subr.bf16.mxu0 0
    %961 = vmatpush1.bf16.msra.mxu0 0
    %962 = vmatprep.subr.bf16.mxu0 0
    %963 = vmatpush1.bf16.msra.mxu0 0
    %964 = vmatprep.subr.bf16.mxu0 0
    %965 = vmatpush1.bf16.msra.mxu0 0
    %966 = vmatprep.subr.bf16.mxu0 0
    %967 = vmatpush1.bf16.msra.mxu0 0
    %968 = vmatprep.subr.bf16.mxu0 0
    %969 = vmatpush1.bf16.msra.mxu0 0
    %970 = vmatprep.subr.bf16.mxu0 0
    %971 = vmatpush1.bf16.msra.mxu0 0
    %972 = vmatprep.subr.bf16.mxu0 0
    %973 = vmatpush1.bf16.msra.mxu0 0
    %974 = vmatprep.subr.bf16.mxu0 0
    %975 = vmatpush1.bf16.msra.mxu0 0
    %976 = vmatprep.subr.bf16.mxu0 0
    %977 = vmatpush1.bf16.msra.mxu0 0
    %978 = vmatprep.subr.bf16.mxu0 0
    %979 = vmatpush1.bf16.msra.mxu0 0
    %980 = vmatprep.subr.bf16.mxu0 0
    %981 = vmatpush1.bf16.msra.mxu0 0
    %982 = vmatprep.mubr.bf16.mxu0 0
    %983 = vmatmul.mubr.bf16.gmra.mrb[0].mxu0 %v948
    %v984 = vpop.f32.mrb[0].mxu0
    %v985 = vadd.f32 0.0, %v984
    %v986 = vpop.f32.mrb[0].mxu0
    %v987 = vpop.f32.mrb[0].mxu0
    %v988 = vadd.f32 0.0, %v987
    %v989 = vpop.f32.mrb[0].mxu0
    %990 = vdwg.mxu0
    %v991 = vpack.c.bf16 %v988, %v985
    %s992 = scalar_lea.vmem %s6, 16
    %v993 = vld [vmem:[%s992] sm:$0xf]
    %v994 = vld [vmem:[%s992 + $0x4] sm:$0xf]
    %v995 = vld [vmem:[%s992 + $0x8] sm:$0xf]
    %v996 = vld [vmem:[%s992 + $0xc] sm:$0xf]
    %v1001 = vunpack.c.l.b16 %v993
    %v1002 = vunpack.c.l.b16 %v994
    %v1003 = vunpack.c.l.b16 %v995
    %v1004 = vunpack.c.l.b16 %v996
    %v1005 = vpack.c.b16 %v1002, %v1001
    %v1006 = vpack.c.b16 %v1004, %v1003
    %v1010 = vsel %vm222, %v991, 0
    %1012 = vmatprep.subr.bf16.mxu0 0
    %1013 = vmatpush1.bf16.msra.mxu0 %v1005
    %1014 = vmatprep.subr.bf16.mxu0 0
    %1015 = vmatpush1.bf16.msra.mxu0 %v1006
    %1016 = vmatprep.subr.bf16.mxu0 0
    %1017 = vmatpush1.bf16.msra.mxu0 0
    %1018 = vmatprep.subr.bf16.mxu0 0
    %1019 = vmatpush1.bf16.msra.mxu0 0
    %1020 = vmatprep.subr.bf16.mxu0 0
    %1021 = vmatpush1.bf16.msra.mxu0 0
    %1022 = vmatprep.subr.bf16.mxu0 0
    %1023 = vmatpush1.bf16.msra.mxu0 0
    %1024 = vmatprep.subr.bf16.mxu0 0
    %1025 = vmatpush1.bf16.msra.mxu0 0
    %1026 = vmatprep.subr.bf16.mxu0 0
    %1027 = vmatpush1.bf16.msra.mxu0 0
    %1028 = vmatprep.subr.bf16.mxu0 0
    %1029 = vmatpush1.bf16.msra.mxu0 0
    %1030 = vmatprep.subr.bf16.mxu0 0
    %1031 = vmatpush1.bf16.msra.mxu0 0
    %1032 = vmatprep.subr.bf16.mxu0 0
    %1033 = vmatpush1.bf16.msra.mxu0 0
    %1034 = vmatprep.subr.bf16.mxu0 0
    %1035 = vmatpush1.bf16.msra.mxu0 0
    %1036 = vmatprep.subr.bf16.mxu0 0
    %1037 = vmatpush1.bf16.msra.mxu0 0
    %1038 = vmatprep.subr.bf16.mxu0 0
    %1039 = vmatpush1.bf16.msra.mxu0 0
    %1040 = vmatprep.subr.bf16.mxu0 0
    %1041 = vmatpush1.bf16.msra.mxu0 0
    %1042 = vmatprep.subr.bf16.mxu0 0
    %1043 = vmatpush1.bf16.msra.mxu0 0
    %1044 = vmatprep.mubr.bf16.mxu0 0
    %1045 = vmatmul.mubr.bf16.gmra.mrb[0].mxu0 %v1010
    %v1046 = vpop.f32.mrb[0].mxu0
    %v1047 = vadd.f32 0.0, %v1046
    %v1048 = vpop.f32.mrb[0].mxu0
    %v1049 = vpop.f32.mrb[0].mxu0
    %v1050 = vadd.f32 0.0, %v1049
    %v1051 = vpop.f32.mrb[0].mxu0
    %1052 = vdwg.mxu0
    %v1053 = vadd.f32 %v729, %v1047
    %v1054 = vadd.f32 %v730, %v1050
    %s1055 = scalar_lea.vmem %s7, 1
    %v1056 = vld [vmem:[%s1055] sm:$0x1]
    %v1057 = vmul.f32 %v1053, %v1053
    %v1058 = vmul.f32 %v1054, %v1054
    %v1059 = vsel %vm222, %v1057, 0.0
    %1060 = vadd.xlane.f32.xlu0 %v1059
    %v1061 = vpop.xlane.xlu0 %1060
    %v1062 = vsel %vm222, %v1058, 0.0
    %1063 = vadd.xlane.f32.xlu0 %v1062
    %v1064 = vpop.xlane.xlu0 %1063
    %v1065 = vmul.f32 %v1061, %v229
    %v1066 = vmul.f32 %v1064, %v229
    %v1067 = vadd.f32 %v1065, 1e-06
    %v1068 = vadd.f32 %v1066, 1e-06
    %v1069 = vrsqrt.pop %v1067
    %v1070 = vrsqrt.pop %v1068
    %v1071 = vmul.f32 %v1053, %v1069
    %v1072 = vmul.f32 %v1054, %v1070
    %v1074 = vlaneseq
    %v1075 = vshrl.u32 %v1074, 7
    %v1076 = vsub.s32 0, %v1075
    %v1077 = vrot.slane %v1056, %v1076
    %v1079 = vmul.f32 %v1071, %v1077
    %v1080 = vmul.f32 %v1072, %v1077
    %v1081 = vpack.c.bf16 %v1080, %v1079
    %s1082 = scalar_lea.vmem %s8, 16
    %v1083 = vld [vmem:[%s1082] sm:$0xf]
    %v1084 = vld [vmem:[%s1082 + $0x4] sm:$0xf]
    %v1085 = vld [vmem:[%s1082 + $0x8] sm:$0xf]
    %v1086 = vld [vmem:[%s1082 + $0xc] sm:$0xf]
    %v1091 = vunpack.c.l.b16 %v1083
    %v1092 = vunpack.c.l.b16 %v1084
    %v1093 = vunpack.c.l.b16 %v1085
    %v1094 = vunpack.c.l.b16 %v1086
    %v1095 = vpack.c.b16 %v1092, %v1091
    %v1096 = vpack.c.b16 %v1094, %v1093
    %v1100 = vsel %vm222, %v1081, 0
    %1102 = vmatprep.subr.bf16.mxu0 0
    %1103 = vmatpush1.bf16.msra.mxu0 %v1095
    %1104 = vmatprep.subr.bf16.mxu0 0
    %1105 = vmatpush1.bf16.msra.mxu0 %v1096
    %1106 = vmatprep.subr.bf16.mxu0 0
    %1107 = vmatpush1.bf16.msra.mxu0 0
    %1108 = vmatprep.subr.bf16.mxu0 0
    %1109 = vmatpush1.bf16.msra.mxu0 0
    %1110 = vmatprep.subr.bf16.mxu0 0
    %1111 = vmatpush1.bf16.msra.mxu0 0
    %1112 = vmatprep.subr.bf16.mxu0 0
    %1113 = vmatpush1.bf16.msra.mxu0 0
    %1114 = vmatprep.subr.bf16.mxu0 0
    %1115 = vmatpush1.bf16.msra.mxu0 0
    %1116 = vmatprep.subr.bf16.mxu0 0
    %1117 = vmatpush1.bf16.msra.mxu0 0
    %1118 = vmatprep.subr.bf16.mxu0 0
    %1119 = vmatpush1.bf16.msra.mxu0 0
    %1120 = vmatprep.subr.bf16.mxu0 0
    %1121 = vmatpush1.bf16.msra.mxu0 0
    %1122 = vmatprep.subr.bf16.mxu0 0
    %1123 = vmatpush1.bf16.msra.mxu0 0
    %1124 = vmatprep.subr.bf16.mxu0 0
    %1125 = vmatpush1.bf16.msra.mxu0 0
    %1126 = vmatprep.subr.bf16.mxu0 0
    %1127 = vmatpush1.bf16.msra.mxu0 0
    %1128 = vmatprep.subr.bf16.mxu0 0
    %1129 = vmatpush1.bf16.msra.mxu0 0
    %1130 = vmatprep.subr.bf16.mxu0 0
    %1131 = vmatpush1.bf16.msra.mxu0 0
    %1132 = vmatprep.subr.bf16.mxu0 0
    %1133 = vmatpush1.bf16.msra.mxu0 0
    %1134 = vmatprep.mubr.bf16.mxu0 0
    %1135 = vmatmul.mubr.bf16.gmra.mrb[0].mxu0 %v1100
    %v1136 = vpop.f32.mrb[0].mxu0
    %v1137 = vadd.f32 0.0, %v1136
    %v1138 = vpop.f32.mrb[0].mxu0
    %v1139 = vpop.f32.mrb[0].mxu0
    %v1140 = vadd.f32 0.0, %v1139
    %v1141 = vpop.f32.mrb[0].mxu0
    %1142 = vdwg.mxu0
    %v1143 = vxor.u32 %v1137, 2147483648
    %v1144 = vxor.u32 %v1140, 2147483648
    %v1145 = vmul.f32 %v1143, 1.442695
    %v1146 = vpow.pop %v1145
    %v1147 = vmul.f32 %v1144, 1.442695
    %v1148 = vpow.pop %v1147
    %v1149 = vadd.f32 %v1146, 1.0
    %v1150 = vadd.f32 %v1148, 1.0
    %v1151 = vrcp.pop %v1149
    %v1152 = vmul.f32 1.0, %v1151
    %v1153 = vrcp.pop %v1150
    %v1154 = vmul.f32 1.0, %v1153
    %v1155 = vmul.f32 %v1137, %v1152
    %v1156 = vmul.f32 %v1140, %v1154
    %1159 = vrot.lane.b32.xlu0 %v1137, 64
    %v1160 = vpop.permute.xlu0 %1159
    %1161 = vrot.lane.b32.xlu0 %v1140, 64
    %v1162 = vpop.permute.xlu0 %1161
    %v1165 = vmul.f32 %v1155, %v1160
    %v1166 = vmul.f32 %v1156, %v1162
    %v1167 = vpack.c.bf16 %v1166, %v1165
    %s1168 = scalar_lea.vmem %s9, 32
    %v1169 = vld [vmem:[%s1168] sm:$0xf]
    %v1170 = vld [vmem:[%s1168 + $0x4] sm:$0xf]
    %v1171 = vld [vmem:[%s1168 + $0x8] sm:$0xf]
    %v1172 = vld [vmem:[%s1168 + $0xc] sm:$0xf]
    %v1173 = vld [vmem:[%s1168 + $0x10] sm:$0xf]
    %v1174 = vld [vmem:[%s1168 + $0x14] sm:$0xf]
    %v1175 = vld [vmem:[%s1168 + $0x18] sm:$0xf]
    %v1176 = vld [vmem:[%s1168 + $0x1c] sm:$0xf]
    %v1185 = vunpack.c.l.b16 %v1169
    %v1186 = vunpack.c.l.b16 %v1170
    %v1187 = vunpack.c.l.b16 %v1171
    %v1188 = vunpack.c.l.b16 %v1172
    %v1189 = vunpack.c.l.b16 %v1173
    %v1190 = vunpack.c.l.b16 %v1174
    %v1191 = vunpack.c.l.b16 %v1175
    %v1192 = vunpack.c.l.b16 %v1176
    %v1193 = vpack.c.b16 %v1186, %v1185
    %v1194 = vpack.c.b16 %v1188, %v1187
    %v1195 = vpack.c.b16 %v1190, %v1189
    %v1196 = vpack.c.b16 %v1192, %v1191
    %v1202 = vsel %vm152, %v1167, 0
    %1204 = vmatprep.subr.bf16.mxu0 0
    %1205 = vmatpush1.bf16.msra.mxu0 %v1193
    %1206 = vmatprep.subr.bf16.mxu0 0
    %1207 = vmatpush1.bf16.msra.mxu0 %v1194
    %1208 = vmatprep.subr.bf16.mxu0 0
    %1209 = vmatpush1.bf16.msra.mxu0 %v1195
    %1210 = vmatprep.subr.bf16.mxu0 0
    %1211 = vmatpush1.bf16.msra.mxu0 %v1196
    %1212 = vmatprep.subr.bf16.mxu0 0
    %1213 = vmatpush1.bf16.msra.mxu0 0
    %1214 = vmatprep.subr.bf16.mxu0 0
    %1215 = vmatpush1.bf16.msra.mxu0 0
    %1216 = vmatprep.subr.bf16.mxu0 0
    %1217 = vmatpush1.bf16.msra.mxu0 0
    %1218 = vmatprep.subr.bf16.mxu0 0
    %1219 = vmatpush1.bf16.msra.mxu0 0
    %1220 = vmatprep.subr.bf16.mxu0 0
    %1221 = vmatpush1.bf16.msra.mxu0 0
    %1222 = vmatprep.subr.bf16.mxu0 0
    %1223 = vmatpush1.bf16.msra.mxu0 0
    %1224 = vmatprep.subr.bf16.mxu0 0
    %1225 = vmatpush1.bf16.msra.mxu0 0
    %1226 = vmatprep.subr.bf16.mxu0 0
    %1227 = vmatpush1.bf16.msra.mxu0 0
    %1228 = vmatprep.subr.bf16.mxu0 0
    %1229 = vmatpush1.bf16.msra.mxu0 0
    %1230 = vmatprep.subr.bf16.mxu0 0
    %1231 = vmatpush1.bf16.msra.mxu0 0
    %1232 = vmatprep.subr.bf16.mxu0 0
    %1233 = vmatpush1.bf16.msra.mxu0 0
    %1234 = vmatprep.subr.bf16.mxu0 0
    %1235 = vmatpush1.bf16.msra.mxu0 0
    %1236 = vmatprep.mubr.bf16.mxu0 0
    %1237 = vmatmul.mubr.bf16.gmra.mrb[0].mxu0 %v1202
    %v1238 = vpop.f32.mrb[0].mxu0
    %v1239 = vadd.f32 0.0, %v1238
    %v1240 = vpop.f32.mrb[0].mxu0
    %v1241 = vpop.f32.mrb[0].mxu0
    %v1242 = vadd.f32 0.0, %v1241
    %v1243 = vpop.f32.mrb[0].mxu0
    %1244 = vdwg.mxu0
    %v1245 = vadd.f32 %v1053, %v1239
    %v1246 = vadd.f32 %v1054, %v1242
    %v1247 = vld [vmem:[%s10] sm:$0x1]
    %v1248 = vmul.f32 %v1245, %v1245
    %v1249 = vmul.f32 %v1246, %v1246
    %v1250 = vsel %vm222, %v1248, 0.0
    %1251 = vadd.xlane.f32.xlu0 %v1250
    %v1252 = vpop.xlane.xlu0 %1251
    %v1253 = vsel %vm222, %v1249, 0.0
    %1254 = vadd.xlane.f32.xlu0 %v1253
    %v1255 = vpop.xlane.xlu0 %1254
    %v1256 = vmul.f32 %v1252, %v229
    %v1257 = vmul.f32 %v1255, %v229
    %v1258 = vadd.f32 %v1256, 1e-06
    %v1259 = vadd.f32 %v1257, 1e-06
    %v1260 = vrsqrt.pop %v1258
    %v1261 = vrsqrt.pop %v1259
    %v1262 = vmul.f32 %v1245, %v1260
    %v1263 = vmul.f32 %v1246, %v1261
    %v1265 = vlaneseq
    %v1266 = vshrl.u32 %v1265, 7
    %v1267 = vsub.s32 0, %v1266
    %v1268 = vrot.slane %v1247, %v1267
    %v1270 = vmul.f32 %v1262, %v1268
    %v1271 = vmul.f32 %v1263, %v1268
    %v1272 = vpack.c.bf16 %v1271, %v1270
    %v1273 = vld [vmem:[%s11] sm:$0xf]
    %v1274 = vld [vmem:[%s11 + $0x4] sm:$0xf]
    %v1275 = vld [vmem:[%s11 + $0x8] sm:$0xf]
    %v1276 = vld [vmem:[%s11 + $0xc] sm:$0xf]
    %v1281 = vunpack.c.l.b16 %v1273
    %v1282 = vunpack.c.l.b16 %v1274
    %v1283 = vunpack.c.l.b16 %v1275
    %v1284 = vunpack.c.l.b16 %v1276
    %v1285 = vpack.c.b16 %v1282, %v1281
    %v1286 = vpack.c.b16 %v1284, %v1283
    %v1290 = vsel %vm222, %v1272, 0
    %1292 = vmatprep.subr.bf16.mxu0 0
    %1293 = vmatpush1.bf16.msra.mxu0 %v1285
    %1294 = vmatprep.subr.bf16.mxu0 0
    %1295 = vmatpush1.bf16.msra.mxu0 %v1286
    %1296 = vmatprep.subr.bf16.mxu0 0
    %1297 = vmatpush1.bf16.msra.mxu0 0
    %1298 = vmatprep.subr.bf16.mxu0 0
    %1299 = vmatpush1.bf16.msra.mxu0 0
    %1300 = vmatprep.subr.bf16.mxu0 0
    %1301 = vmatpush1.bf16.msra.mxu0 0
    %1302 = vmatprep.subr.bf16.mxu0 0
    %1303 = vmatpush1.bf16.msra.mxu0 0
    %1304 = vmatprep.subr.bf16.mxu0 0
    %1305 = vmatpush1.bf16.msra.mxu0 0
    %1306 = vmatprep.subr.bf16.mxu0 0
    %1307 = vmatpush1.bf16.msra.mxu0 0
    %1308 = vmatprep.subr.bf16.mxu0 0
    %1309 = vmatpush1.bf16.msra.mxu0 0
    %1310 = vmatprep.subr.bf16.mxu0 0
    %1311 = vmatpush1.bf16.msra.mxu0 0
    %1312 = vmatprep.subr.bf16.mxu0 0
    %1313 = vmatpush1.bf16.msra.mxu0 0
    %1314 = vmatprep.subr.bf16.mxu0 0
    %1315 = vmatpush1.bf16.msra.mxu0 0
    %1316 = vmatprep.subr.bf16.mxu0 0
    %1317 = vmatpush1.bf16.msra.mxu0 0
    %1318 = vmatprep.subr.bf16.mxu0 0
    %1319 = vmatpush1.bf16.msra.mxu0 0
    %1320 = vmatprep.subr.bf16.mxu0 0
    %1321 = vmatpush1.bf16.msra.mxu0 0
    %1322 = vmatprep.subr.bf16.mxu0 0
    %1323 = vmatpush1.bf16.msra.mxu0 0
    %1324 = vmatprep.mubr.bf16.mxu0 0
    %1325 = vmatmul.mubr.bf16.gmra.mrb[0].mxu0 %v1290
    %v1326 = vpop.f32.mrb[0].mxu0
    %v1327 = vadd.f32 0.0, %v1326
    %v1328 = vpop.f32.mrb[0].mxu0
    %v1329 = vpop.f32.mrb[0].mxu0
    %v1330 = vadd.f32 0.0, %v1329
    %v1331 = vpop.f32.mrb[0].mxu0
    %1332 = vdwg.mxu0
    %v1333 = vld [vmem:[%s2] sm:$0xff]
    %v1334 = vld [vmem:[%s2 + $0x8] sm:$0xff]
    %1335 = vmax.xlane.f32.xlu0 %v1327
    %v1336 = vpop.xlane.xlu0 %1335
    %1337 = vmax.xlane.f32.xlu0 %v1330
    %v1338 = vpop.xlane.xlu0 %1337
    %v1339 = vsub.f32 %v1327, %v1336
    %v1340 = vsub.f32 %v1330, %v1338
    %v1341 = vmul.f32 %v1339, 1.442695
    %v1342 = vpow.pop %v1341
    %v1343 = vmul.f32 %v1340, 1.442695
    %v1344 = vpow.pop %v1343
    %1345 = vadd.xlane.f32.xlu0 %v1342
    %v1346 = vpop.xlane.xlu0 %1345
    %1347 = vadd.xlane.f32.xlu0 %v1344
    %v1348 = vpop.xlane.xlu0 %1347
    %v1349 = vlog2.pop %v1346
    %v1350 = vmul.f32 %v1349, 0.6931472
    %v1351 = vlog2.pop %v1348
    %v1352 = vmul.f32 %v1351, 0.6931472
    %v1353 = vadd.f32 %v1350, %v1336
    %v1354 = vadd.f32 %v1352, %v1338
    %1355 = vset.pattern.permute.xlu0 0
    %1356 = vperm.xlu0 %1355, %v1333
    %v1357 = vpop.permute.xlu0 %1356
    %1358 = vset.pattern.permute.xlu0 0
    %1359 = vperm.xlu0 %1358, %v1334
    %v1360 = vpop.permute.xlu0 %1359
    %vm1361 = vcmp.eq.s32.totalorder %v200, %v1357
    %vm1362 = vcmp.eq.s32.totalorder %v200, %v1360
    %v1363 = vsel %vm1361, 1, 0
    %v1364 = vsel %vm1362, 1, 0
    %v1365 = vcvt.s32.f32 %v1363
    %v1366 = vcvt.s32.f32 %v1364
    %v1367 = vmul.f32 %v1327, %v1365
    %v1368 = vmul.f32 %v1330, %v1366
    %1369 = vadd.xlane.f32.xlu0 %v1367
    %v1370 = vpop.xlane.xlu0 %1369
    %1371 = vadd.xlane.f32.xlu0 %v1368
    %v1372 = vpop.xlane.xlu0 %1371
    %vm1373 = vcmp.ne.s32.totalorder %v1333, 4294967096
    %vm1374 = vcmp.ne.s32.totalorder %v1334, 4294967096
    %v1375 = vsel %vm1373, 1, 0
    %v1376 = vsel %vm1374, 1, 0
    %v1377 = vcvt.s32.f32 %v1375
    %v1378 = vcvt.s32.f32 %v1376
    %v1379 = vsub.f32 %v1353, %v1370
    %v1380 = vsub.f32 %v1354, %v1372
    %v1381 = vmul.f32 %v1379, %v1377
    %v1382 = vmul.f32 %v1380, %v1378
    %vm1383 = vcmask 7168
    %v1384 = vsel %vm1383, %v1381, 0.0
    %v1385 = vsel %vm1383, %v1382, 0.0
    %v1386 = vadd.f32 %v1384, %v1385
    %1387 = vadd.xlane.f32.xlu0 %v1386
    %v1388 = vpop.xlane.xlu0 %1387
    %v1389 = vrot.slane %v1388, 4
    %v1390 = vadd.f32 %v1388, %v1389
    %v1391 = vrot.slane %v1390, 2
    %v1392 = vadd.f32 %v1390, %v1391
    %v1393 = vrot.slane %v1392, 1
    %v1394 = vadd.f32 %v1392, %v1393
    %s1395 = vtos %v1394
    %v1396 = vsel %vm1383, %v1377, 0.0
    %v1397 = vsel %vm1383, %v1378, 0.0
    %v1398 = vadd.f32 %v1396, %v1397
    %1399 = vadd.xlane.f32.xlu0 %v1398
    %v1400 = vpop.xlane.xlu0 %1399
    %v1401 = vrot.slane %v1400, 4
    %v1402 = vadd.f32 %v1400, %v1401
    %v1403 = vrot.slane %v1402, 2
    %v1404 = vadd.f32 %v1402, %v1403
    %v1405 = vrot.slane %v1404, 1
    %v1406 = vadd.f32 %v1404, %v1405
    %s1407 = vtos %v1406
    %s1408 = smax.f32 %s1407, 1.0
    %v1409 = vstv %s1408
    %v1410 = vrcp.pop %v1409
    %s1411 = vtos %v1410
    %s1412 = smul.f32 %s1395, %s1411
    %v1413 = vstv %s1412
    %1414 = vst [vmem:[#allocation2] sm:$0x1] %v1413
    // Predicated region
    $region50: #{tpu_custom_call.1} parent=1 // pred_check
      _
    $region51: #{tpu_custom_call.1} parent=1 // pred_check_branch
      %1416 = sbr.rel (0) target = $region53
    $region52: #{tpu_custom_call.1} parent=1 // pred_region
      %s1418 = ssub.s32 16, 16
      %1419 = vsyncadd [#allocation3], %s1418
      %s1421 = sshll.u32 [#allocation2], 4
      %s1422 = int_to_ptr.vmem [resolvable:$true] %s1421
      %1424 = dma.vmem_to_hbm [thread:$0]  %s1422, 16, %s12, [#allocation3]
    $region53: #{tpu_custom_call.1} parent=1 // pred_fallthru
      _
    // Predicated region
    $region54: #{tpu_custom_call.1} parent=1 // pred_check
      _
    $region55: #{tpu_custom_call.1} parent=1 // pred_check_branch
      %1426 = sbr.rel (0) target = $region57
    $region56: #{tpu_custom_call.1} parent=1 // pred_region
      %1427 = dma.done [#allocation3], 16
    $region57: #{tpu_custom_call.1} parent=1 // pred_fallthru
      _
    %1428 = vsyncpa [#allocation3], 1

</llo_original>
